<compile_context>
chip_gen: v7x
topology: tpu7x:2x2x1
jax: 0.10.0
libtpu: 0.0.40
codegen_flags: <defaults>
</compile_context>

<pallas_src>
import functools

import jax
import jax.numpy as jnp
from jax import lax
from jax.experimental import pallas as pl
from jax.experimental.pallas import tpu as pltpu

EMBEDDING_SIZE = 64
NUM_HEADS = 4
HEAD_SIZE = EMBEDDING_SIZE // NUM_HEADS
LN_EPS = 1e-5


def _layernorm(x, gamma, beta):
    mu = jnp.mean(x, axis=-1, keepdims=True)
    var = jnp.mean((x - mu) ** 2, axis=-1, keepdims=True)
    return (x - mu) * lax.rsqrt(var + LN_EPS) * gamma + beta


def encoder_block_kernel(x_ref, wqkv_ref, wo_ref, w1_ref, w2_ref, vec_ref, o_ref,
                         *, mxu_bf16):
    Bb, T, E = x_ref.shape
    H, D = NUM_HEADS, HEAD_SIZE
    N = Bb * T
    Z = H * Bb

    # Packed (8, E) vector block: static sublane slices of the resident VMEM tile.
    bo,  ln1g, ln1b = vec_ref[0:1, :], vec_ref[1:2, :], vec_ref[2:3, :]
    b1,  b2         = vec_ref[3:4, :], vec_ref[4:5, :]
    ln2g, ln2b      = vec_ref[5:6, :], vec_ref[6:7, :]

    def mm(a, w):
        # MXU matmul; on the bf16 path weights are ALREADY bf16 (host-side cast),
        # only the activation operand is cast here.  Always accumulate in f32.
        if mxu_bf16:
            a = a.astype(jnp.bfloat16)
        return jnp.dot(a, w, preferred_element_type=jnp.float32)

    # Flatten the batch block; all row-wise work runs on (N, E) = (Bb*T, E) at once.
    x = x_ref[...].reshape(N, E)

    # --- fused QKV projection (1/sqrt(D) already folded into the Q columns) ---
    # Columns are head-major: [h, (q|k|v), d].
    qkv = mm(x, wqkv_ref[...])                                   # (N, 3E)

    # --- head split: H block slices + one stack, then a leading-dim reshape ---
    zb = jnp.stack([qkv[:, h * 3 * D:(h + 1) * 3 * D] for h in range(H)], axis=0)
    zb = zb.reshape(Z, T, 3 * D)                                 # z = (head, batch)
    if mxu_bf16:
        zb = zb.astype(jnp.bfloat16)
    q = zb[..., 0:D]
    k = zb[..., D:2 * D]
    v = zb[..., 2 * D:3 * D]

    # --- batched (unmasked) self-attention over z = H*Bb tiles ---
    # TODO(synk): at production T (>=128) verify via bundle dump that this z-batched
    # einsum is not unrolled into tiny (<1%-occupancy) MXU pushes; for tiny T a VPU
    # mul+lane-reduce or block-diagonal-K single-matmul formulation may win.
    s = jnp.einsum('ztd,zsd->zts', q, k, preferred_element_type=jnp.float32)
    s = s - jnp.max(s, axis=-1, keepdims=True)
    p = jnp.exp(s)
    # approx reciprocal (EUP slot): softmax rows sum to ~1, not exactly 1.
    p = p * pl.reciprocal(jnp.sum(p, axis=-1, keepdims=True), approx=True)
    if mxu_bf16:
        p = p.astype(jnp.bfloat16)
    ctx = jnp.einsum('zts,zsd->ztd', p, v, preferred_element_type=jnp.float32)

    # --- head merge: single 4-way lane concat back to (N, E) (head-major cols) ---
    ctx = ctx.reshape(H, N, D)
    attn = jnp.concatenate([ctx[h] for h in range(H)], axis=-1)  # (N, E)

    proj = mm(attn, wo_ref[...]) + bo
    # Dropout(0.1) -> identity in eval mode.

    # --- residual + LayerNorm 1 (f32 on the VPU) ---
    n1 = _layernorm(x + proj, ln1g, ln1b)

    # --- feed forward: Linear -> (Dropout) -> ReLU -> (Dropout) -> Linear ---
    f = jnp.maximum(mm(n1, w1_ref[...]) + b1, 0.0)
    f = mm(f, w2_ref[...]) + b2

    # --- residual + LayerNorm 2 ---
    out = _layernorm(f + n1, ln2g, ln2b)

    # NOTE: output minor dim E=64 (<128 lanes) -> masked vst on the final store.
    # An in-kernel repack to a 128-lane-dense view costs a relayout that outweighs
    # the saving at these shapes on v6e/v7x; re-check on v5e (single vst slot).
    o_ref[...] = out.reshape(Bb, T, E).astype(o_ref.dtype)


def _step_vmem_bytes(Bb, T, mxu_bf16):
    """Rough per-grid-step VMEM footprint (double-buffered I/O + weights + f32
    temporaries).  Used to bound the block size and to set vmem_limit_bytes."""
    E, H = EMBEDDING_SIZE, NUM_HEADS
    N = Bb * T
    f32 = 4
    wb = 2 if mxu_bf16 else 4
    io = 2 * (2 * N * E * f32)                     # x + out blocks, double-buffered
    weights = 2 * (6 * E * E * wb + 8 * E * f32)   # wqkv(3EE)+wo+w1+w2, packed vecs
    acts = 9 * N * E * f32                         # qkv + stacked split + q/k/v
    acts += 3 * H * Bb * T * T * f32               # scores / probs (+ slack)
    acts += 8 * N * E * f32                        # ctx/attn/proj/n1/ff temporaries
    return io + weights + acts


def _pick_block_b(B, T, *, target_rows=1024, vmem_budget=24 << 20, mxu_bf16=False):
    """Largest divisor of B such that (a) Bb*T stays around `target_rows`,
    (b) the grid keeps >= 2 parallel steps when B >= 2 (both v7x TensorCores
    get work), and (c) the per-step VMEM estimate fits `vmem_budget`."""
    cap = min(max(1, B // 2), max(1, pl.cdiv(target_rows, T)))
    best = 1
    for bb in range(1, cap + 1):
        if B % bb == 0 and _step_vmem_bytes(bb, T, mxu_bf16) <= vmem_budget:
            best = bb
    return best


def encoder_block(data, fused_params, *, block_b=None, target_rows=1024):
    B, T, E = data.shape
    assert E == EMBEDDING_SIZE
    p = fused_params
    mxu_bf16 = (p["wqkv"].dtype == jnp.bfloat16)     # inferred from host-side prep
    Bb = block_b if block_b is not None else _pick_block_b(
        B, T, target_rows=target_rows, mxu_bf16=mxu_bf16)
    if B % Bb != 0:
        raise ValueError(f"block_b={Bb} must divide batch size B={B}")

    vmem_limit = int(min(64 << 20, max(32 << 20, 2 * _step_vmem_bytes(Bb, T, mxu_bf16))))

    kernel = functools.partial(encoder_block_kernel, mxu_bf16=mxu_bf16)
    const = lambda r, c: pl.BlockSpec((r, c), lambda b: (0, 0))
    # NOTE: constant-index weight blocks are never re-DMA'd across grid steps; their
    # default double-buffer (~0.1 MiB total) is left as-is (pl.Buffered(1) would only
    # matter when pushing the row block against the v7x VMEM limit).

    return pl.pallas_call(
        kernel,
        out_shape=jax.ShapeDtypeStruct((B, T, E), data.dtype),
        grid_spec=pltpu.PrefetchScalarGridSpec(
            num_scalar_prefetch=0,
            grid=(B // Bb,),
            in_specs=[
                pl.BlockSpec((Bb, T, E), lambda b: (b, 0, 0)),   # x block: Bb*T rows
                const(E, 3 * E),                                 # fused head-major Wqkv
                const(E, E),                                     # Wo
                const(E, E),                                     # FF W1
                const(E, E),                                     # FF W2
                const(8, E),                                     # packed bias/LN vectors
            ],
            out_specs=pl.BlockSpec((Bb, T, E), lambda b: (b, 0, 0)),
        ),
        compiler_params=pltpu.CompilerParams(
            dimension_semantics=("parallel",),
            vmem_limit_bytes=vmem_limit,
        ),
    )(data, p["wqkv"], p["wo"], p["w1"], p["w2"], p["vecs"])


def _default_mxu_bf16():
    """bf16 MXU operands by default on v6e/v7x (per perf review); f32 elsewhere."""
    try:
        kind = jax.devices()[0].device_kind.lower()
    except Exception:
        return False
    return ("v6" in kind) or ("v7" in kind)


def fuse_params(params, mxu_bf16=None):
    """Host-side, one-time parameter prep:
      * fold 1/sqrt(HEAD_SIZE) into the Q weight,
      * fuse Q|K|V into one (E, 3E) weight with HEAD-MAJOR columns (h, {q,k,v}, d),
      * pack the seven (1, E) bias / LayerNorm vectors into one (8, E) block,
      * optionally cast the four matmul weights to bf16 (halves weight DMA/VMEM).
    """
    if mxu_bf16 is None:
        mxu_bf16 = _default_mxu_bf16()
    E, H, D = EMBEDDING_SIZE, NUM_HEADS, HEAD_SIZE
    scale = 1.0 / (D ** 0.5)
    wq = (params["wq"] * scale).reshape(E, H, D)
    wk = params["wk"].reshape(E, H, D)
    wv = params["wv"].reshape(E, H, D)
    wqkv = jnp.stack([wq, wk, wv], axis=2).reshape(E, 3 * E)     # columns (h, qkv, d)
    vecs = jnp.concatenate(
        [params["bo"], params["ln1_g"], params["ln1_b"], params["b1"],
         params["b2"], params["ln2_g"], params["ln2_b"],
         jnp.zeros((1, E), jnp.float32)], axis=0)                # (8, E); row 7 = pad
    wdt = jnp.bfloat16 if mxu_bf16 else jnp.float32
    return {
        "wqkv": wqkv.astype(wdt),
        "wo": params["wo"].astype(wdt),
        "w1": params["w1"].astype(wdt),
        "w2": params["w2"].astype(wdt),
        "vecs": vecs.astype(jnp.float32),    # biases / LN params stay f32
    }


def reference_encoder_block(x, p):
    """Pure-JAX reference matching PyTorch eval-mode semantics (unfused params)."""
    q = x @ p["wq"]
    k = x @ p["wk"]
    v = x @ p["wv"]
    outs = []
    for h in range(NUM_HEADS):
        sl = slice(h * HEAD_SIZE, (h + 1) * HEAD_SIZE)
        s = (q[..., sl] @ jnp.swapaxes(k[..., sl], -2, -1)) / (HEAD_SIZE ** 0.5)
        w = jax.nn.softmax(s, axis=-1)
        outs.append(w @ v[..., sl])
    attn = jnp.concatenate(outs, axis=-1) @ p["wo"] + p["bo"]
    n1 = _layernorm(x + attn, p["ln1_g"], p["ln1_b"])
    f = jnp.maximum(n1 @ p["w1"] + p["b1"], 0.0) @ p["w2"] + p["b2"]
    return _layernorm(f + n1, p["ln2_g"], p["ln2_b"])


def init_params(key):
    E = EMBEDDING_SIZE
    ks = jax.random.split(key, 8)
    scale = 1.0 / (E ** 0.5)

    def u(k, shape):
        return jax.random.uniform(k, shape, jnp.float32, -scale, scale)

    return {
        # per-head Q/K/V weights concatenated along output dim, stored (in, out)
        "wq": u(ks[0], (E, E)),
        "wk": u(ks[1], (E, E)),
        "wv": u(ks[2], (E, E)),
        "wo": u(ks[3], (E, E)),
        "bo": u(ks[4], (1, E)),
        "ln1_g": jnp.ones((1, E), jnp.float32),
        "ln1_b": jnp.zeros((1, E), jnp.float32),
        "w1": u(ks[5], (E, E)),
        "b1": u(ks[6], (1, E)),
        "w2": u(ks[7], (E, E)),
        "b2": jnp.zeros((1, E), jnp.float32),
        "ln2_g": jnp.ones((1, E), jnp.float32),
        "ln2_b": jnp.zeros((1, E), jnp.float32),
    }


if __name__ == "__main__":
    key = jax.random.PRNGKey(0)
    kx, kp = jax.random.split(key)

    B, T, E = 2, 8, EMBEDDING_SIZE
    data = jax.random.normal(kx, (B, T, E), jnp.float32)
    params = init_params(kp)
    ref = reference_encoder_block(data, params)

    # f32 MXU path (exact apart from the approx softmax reciprocal).
    out_f32 = jax.block_until_ready(
        encoder_block(data, fuse_params(params, mxu_bf16=False)))
    assert out_f32.shape == (B, T, E)
    assert jnp.allclose(out_f32, ref, atol=2e-3, rtol=2e-3), "f32 path mismatch vs reference"

    # bf16 MXU path (recommended default on v6e/v7x): bf16 operands, f32 accumulation.
    out_bf16 = jax.block_until_ready(
        encoder_block(data, fuse_params(params, mxu_bf16=True)))
    assert out_bf16.shape == (B, T, E)
    assert jnp.allclose(out_bf16, ref, atol=5e-2, rtol=5e-2), "bf16 path mismatch vs reference"

    print("KERNEL_OK")
</pallas_src>

<mosaic_0001>
module attributes {stable_mosaic.version = 11 : i64} {
  func.func @encoder_block_kernel(%arg0: i32, %arg1: memref<1x8x64xf32, #tpu.memory_space<vmem>>, %arg2: memref<64x192xf32, #tpu.memory_space<vmem>>, %arg3: memref<64x64xf32, #tpu.memory_space<vmem>>, %arg4: memref<64x64xf32, #tpu.memory_space<vmem>>, %arg5: memref<64x64xf32, #tpu.memory_space<vmem>>, %arg6: memref<8x64xf32, #tpu.memory_space<vmem>>, %arg7: memref<1x8x64xf32, #tpu.memory_space<vmem>>) attributes {dimension_semantics = [#tpu.dimension_semantics<parallel>], iteration_bounds = array<i64: 2>, scalar_prefetch = 0 : i64, scratch_operands = 0 : i64, tpu.core_type = #tpu.core_type<tc>, window_params = [{transform_indices = @transform_0, window_bounds = array<i64: 1, 8, 64>}, {pipeline_mode = #tpu.pipeline_mode<synchronous>, transform_indices = @transform_1, window_bounds = array<i64: 64, 192>}, {pipeline_mode = #tpu.pipeline_mode<synchronous>, transform_indices = @transform_2, window_bounds = array<i64: 64, 64>}, {pipeline_mode = #tpu.pipeline_mode<synchronous>, transform_indices = @transform_3, window_bounds = array<i64: 64, 64>}, {pipeline_mode = #tpu.pipeline_mode<synchronous>, transform_indices = @transform_4, window_bounds = array<i64: 64, 64>}, {pipeline_mode = #tpu.pipeline_mode<synchronous>, transform_indices = @transform_5, window_bounds = array<i64: 8, 64>}, {transform_indices = @transform_6, window_bounds = array<i64: 1, 8, 64>}]} {
    %c0 = arith.constant 0 : index
    %c0_0 = arith.constant 0 : index
    %0 = vector.load %arg6[%c0, %c0_0] : memref<8x64xf32, #tpu.memory_space<vmem>>, vector<1x64xf32>
    %c1 = arith.constant 1 : index
    %c0_1 = arith.constant 0 : index
    %1 = vector.load %arg6[%c1, %c0_1] : memref<8x64xf32, #tpu.memory_space<vmem>>, vector<1x64xf32>
    %c2 = arith.constant 2 : index
    %c0_2 = arith.constant 0 : index
    %2 = vector.load %arg6[%c2, %c0_2] : memref<8x64xf32, #tpu.memory_space<vmem>>, vector<1x64xf32>
    %c3 = arith.constant 3 : index
    %c0_3 = arith.constant 0 : index
    %3 = vector.load %arg6[%c3, %c0_3] : memref<8x64xf32, #tpu.memory_space<vmem>>, vector<1x64xf32>
    %c4 = arith.constant 4 : index
    %c0_4 = arith.constant 0 : index
    %4 = vector.load %arg6[%c4, %c0_4] : memref<8x64xf32, #tpu.memory_space<vmem>>, vector<1x64xf32>
    %c5 = arith.constant 5 : index
    %c0_5 = arith.constant 0 : index
    %5 = vector.load %arg6[%c5, %c0_5] : memref<8x64xf32, #tpu.memory_space<vmem>>, vector<1x64xf32>
    %c6 = arith.constant 6 : index
    %c0_6 = arith.constant 0 : index
    %6 = vector.load %arg6[%c6, %c0_6] : memref<8x64xf32, #tpu.memory_space<vmem>>, vector<1x64xf32>
    %c0_7 = arith.constant 0 : index
    %c0_8 = arith.constant 0 : index
    %c0_9 = arith.constant 0 : index
    %7 = vector.load %arg1[%c0_7, %c0_8, %c0_9] : memref<1x8x64xf32, #tpu.memory_space<vmem>>, vector<1x8x64xf32>
    %8 = vector.shape_cast %7 : vector<1x8x64xf32> to vector<8x64xf32>
    %c0_10 = arith.constant 0 : index
    %c0_11 = arith.constant 0 : index
    %9 = vector.load %arg2[%c0_10, %c0_11] : memref<64x192xf32, #tpu.memory_space<vmem>>, vector<64x192xf32>
    %cst = arith.constant dense<0.000000e+00> : vector<8x192xf32>
    %10 = tpu.matmul %8, %9, %cst {dimension_numbers = #tpu.dot_dimension_numbers<[1], [0], [0], [1], [0, 0, 1, 1], [], []>} : vector<8x64xf32>, vector<64x192xf32>, vector<8x192xf32> -> vector<8x192xf32>
    %11 = vector.extract_strided_slice %10 {offsets = [0, 0], sizes = [8, 48], strides = [1, 1]} : vector<8x192xf32> to vector<8x48xf32>
    %12 = vector.extract_strided_slice %10 {offsets = [0, 48], sizes = [8, 48], strides = [1, 1]} : vector<8x192xf32> to vector<8x48xf32>
    %13 = vector.extract_strided_slice %10 {offsets = [0, 96], sizes = [8, 48], strides = [1, 1]} : vector<8x192xf32> to vector<8x48xf32>
    %14 = vector.extract_strided_slice %10 {offsets = [0, 144], sizes = [8, 48], strides = [1, 1]} : vector<8x192xf32> to vector<8x48xf32>
    %15 = vector.shape_cast %11 : vector<8x48xf32> to vector<1x8x48xf32>
    %16 = vector.shape_cast %12 : vector<8x48xf32> to vector<1x8x48xf32>
    %17 = vector.shape_cast %13 : vector<8x48xf32> to vector<1x8x48xf32>
    %18 = vector.shape_cast %14 : vector<8x48xf32> to vector<1x8x48xf32>
    %19 = tpu.concatenate %15, %16, %17, %18 in 0 : vector<1x8x48xf32>, vector<1x8x48xf32>, vector<1x8x48xf32>, vector<1x8x48xf32> -> vector<4x8x48xf32>
    %20 = vector.extract_strided_slice %19 {offsets = [0, 0, 0], sizes = [4, 8, 16], strides = [1, 1, 1]} : vector<4x8x48xf32> to vector<4x8x16xf32>
    %21 = vector.extract_strided_slice %19 {offsets = [0, 0, 16], sizes = [4, 8, 16], strides = [1, 1, 1]} : vector<4x8x48xf32> to vector<4x8x16xf32>
    %22 = vector.extract_strided_slice %19 {offsets = [0, 0, 32], sizes = [4, 8, 16], strides = [1, 1, 1]} : vector<4x8x48xf32> to vector<4x8x16xf32>
    "tpu.trace_start"() <{level = 10 : i32, message = "ztd,zsd->zts"}> : () -> ()
    %cst_12 = arith.constant dense<0.000000e+00> : vector<4x8x8xf32>
    %23 = tpu.matmul %20, %21, %cst_12 {dimension_numbers = #tpu.dot_dimension_numbers<[2], [2], [1], [1], [0, 0, 0, 1, 1, 1], [0], [0]>} : vector<4x8x16xf32>, vector<4x8x16xf32>, vector<4x8x8xf32> -> vector<4x8x8xf32>
    "tpu.trace_stop"() : () -> ()
    %cst_13 = arith.constant dense<0xFF800000> : vector<4x8xf32>
    %24 = vector.multi_reduction <maximumf>, %23, %cst_13 [2] : vector<4x8x8xf32> to vector<4x8xf32>
    %25 = vector.shape_cast %24 : vector<4x8xf32> to vector<4x8x1xf32>
    %26 = vector.broadcast %25 : vector<4x8x1xf32> to vector<4x8x8xf32>
    %27 = arith.subf %23, %26 : vector<4x8x8xf32>
    %28 = math.exp %27 : vector<4x8x8xf32>
    %cst_14 = arith.constant dense<0.000000e+00> : vector<4x8xf32>
    %29 = vector.multi_reduction <add>, %28, %cst_14 [2] : vector<4x8x8xf32> to vector<4x8xf32>
    %30 = vector.shape_cast %29 : vector<4x8xf32> to vector<4x8x1xf32>
    %31 = tpu.reciprocal %30 {approx = true} : vector<4x8x1xf32> -> vector<4x8x1xf32>
    %32 = vector.broadcast %31 : vector<4x8x1xf32> to vector<4x8x8xf32>
    %33 = arith.mulf %28, %32 : vector<4x8x8xf32>
    "tpu.trace_start"() <{level = 10 : i32, message = "zts,zsd->ztd"}> : () -> ()
    %cst_15 = arith.constant dense<0.000000e+00> : vector<4x8x16xf32>
    %34 = tpu.matmul %33, %22, %cst_15 {dimension_numbers = #tpu.dot_dimension_numbers<[2], [1], [1], [2], [0, 0, 0, 1, 1, 2], [0], [0]>} : vector<4x8x8xf32>, vector<4x8x16xf32>, vector<4x8x16xf32> -> vector<4x8x16xf32>
    "tpu.trace_stop"() : () -> ()
    %35 = vector.extract_strided_slice %34 {offsets = [0, 0, 0], sizes = [1, 8, 16], strides = [1, 1, 1]} : vector<4x8x16xf32> to vector<1x8x16xf32>
    %36 = vector.shape_cast %35 : vector<1x8x16xf32> to vector<8x16xf32>
    %37 = vector.extract_strided_slice %34 {offsets = [1, 0, 0], sizes = [1, 8, 16], strides = [1, 1, 1]} : vector<4x8x16xf32> to vector<1x8x16xf32>
    %38 = vector.shape_cast %37 : vector<1x8x16xf32> to vector<8x16xf32>
    %39 = vector.extract_strided_slice %34 {offsets = [2, 0, 0], sizes = [1, 8, 16], strides = [1, 1, 1]} : vector<4x8x16xf32> to vector<1x8x16xf32>
    %40 = vector.shape_cast %39 : vector<1x8x16xf32> to vector<8x16xf32>
    %41 = vector.extract_strided_slice %34 {offsets = [3, 0, 0], sizes = [1, 8, 16], strides = [1, 1, 1]} : vector<4x8x16xf32> to vector<1x8x16xf32>
    %42 = vector.shape_cast %41 : vector<1x8x16xf32> to vector<8x16xf32>
    %43 = tpu.concatenate %36, %38, %40, %42 in 1 : vector<8x16xf32>, vector<8x16xf32>, vector<8x16xf32>, vector<8x16xf32> -> vector<8x64xf32>
    %c0_16 = arith.constant 0 : index
    %c0_17 = arith.constant 0 : index
    %44 = vector.load %arg3[%c0_16, %c0_17] : memref<64x64xf32, #tpu.memory_space<vmem>>, vector<64x64xf32>
    %cst_18 = arith.constant dense<0.000000e+00> : vector<8x64xf32>
    %45 = tpu.matmul %43, %44, %cst_18 {dimension_numbers = #tpu.dot_dimension_numbers<[1], [0], [0], [1], [0, 0, 1, 1], [], []>} : vector<8x64xf32>, vector<64x64xf32>, vector<8x64xf32> -> vector<8x64xf32>
    %46 = vector.broadcast %0 : vector<1x64xf32> to vector<8x64xf32>
    %47 = arith.addf %45, %46 : vector<8x64xf32>
    %48 = arith.addf %8, %47 : vector<8x64xf32>
    %cst_19 = arith.constant dense<0.000000e+00> : vector<8xf32>
    %49 = vector.multi_reduction <add>, %48, %cst_19 [1] : vector<8x64xf32> to vector<8xf32>
    %50 = vector.shape_cast %49 : vector<8xf32> to vector<8x1xf32>
    %cst_20 = arith.constant 6.400000e+01 : f32
    %51 = vector.broadcast %cst_20 : f32 to vector<8x1xf32>
    %52 = arith.divf %50, %51 : vector<8x1xf32>
    %53 = vector.broadcast %52 : vector<8x1xf32> to vector<8x64xf32>
    %54 = arith.subf %48, %53 : vector<8x64xf32>
    %55 = arith.mulf %54, %54 : vector<8x64xf32>
    %cst_21 = arith.constant dense<0.000000e+00> : vector<8xf32>
    %56 = vector.multi_reduction <add>, %55, %cst_21 [1] : vector<8x64xf32> to vector<8xf32>
    %57 = vector.shape_cast %56 : vector<8xf32> to vector<8x1xf32>
    %cst_22 = arith.constant 6.400000e+01 : f32
    %58 = vector.broadcast %cst_22 : f32 to vector<8x1xf32>
    %59 = arith.divf %57, %58 : vector<8x1xf32>
    %60 = vector.broadcast %52 : vector<8x1xf32> to vector<8x64xf32>
    %61 = arith.subf %48, %60 : vector<8x64xf32>
    %cst_23 = arith.constant 9.99999974E-6 : f32
    %62 = vector.broadcast %cst_23 : f32 to vector<8x1xf32>
    %63 = arith.addf %59, %62 : vector<8x1xf32>
    %64 = math.rsqrt %63 : vector<8x1xf32>
    %65 = vector.broadcast %64 : vector<8x1xf32> to vector<8x64xf32>
    %66 = arith.mulf %61, %65 : vector<8x64xf32>
    %67 = vector.broadcast %1 : vector<1x64xf32> to vector<8x64xf32>
    %68 = arith.mulf %66, %67 : vector<8x64xf32>
    %69 = vector.broadcast %2 : vector<1x64xf32> to vector<8x64xf32>
    %70 = arith.addf %68, %69 : vector<8x64xf32>
    %c0_24 = arith.constant 0 : index
    %c0_25 = arith.constant 0 : index
    %71 = vector.load %arg4[%c0_24, %c0_25] : memref<64x64xf32, #tpu.memory_space<vmem>>, vector<64x64xf32>
    %cst_26 = arith.constant dense<0.000000e+00> : vector<8x64xf32>
    %72 = tpu.matmul %70, %71, %cst_26 {dimension_numbers = #tpu.dot_dimension_numbers<[1], [0], [0], [1], [0, 0, 1, 1], [], []>} : vector<8x64xf32>, vector<64x64xf32>, vector<8x64xf32> -> vector<8x64xf32>
    %73 = vector.broadcast %3 : vector<1x64xf32> to vector<8x64xf32>
    %74 = arith.addf %72, %73 : vector<8x64xf32>
    %cst_27 = arith.constant 0.000000e+00 : f32
    %75 = vector.broadcast %cst_27 : f32 to vector<8x64xf32>
    %76 = arith.maximumf %74, %75 : vector<8x64xf32>
    %c0_28 = arith.constant 0 : index
    %c0_29 = arith.constant 0 : index
    %77 = vector.load %arg5[%c0_28, %c0_29] : memref<64x64xf32, #tpu.memory_space<vmem>>, vector<64x64xf32>
    %cst_30 = arith.constant dense<0.000000e+00> : vector<8x64xf32>
    %78 = tpu.matmul %76, %77, %cst_30 {dimension_numbers = #tpu.dot_dimension_numbers<[1], [0], [0], [1], [0, 0, 1, 1], [], []>} : vector<8x64xf32>, vector<64x64xf32>, vector<8x64xf32> -> vector<8x64xf32>
    %79 = vector.broadcast %4 : vector<1x64xf32> to vector<8x64xf32>
    %80 = arith.addf %78, %79 : vector<8x64xf32>
    %81 = arith.addf %80, %70 : vector<8x64xf32>
    %cst_31 = arith.constant dense<0.000000e+00> : vector<8xf32>
    %82 = vector.multi_reduction <add>, %81, %cst_31 [1] : vector<8x64xf32> to vector<8xf32>
    %83 = vector.shape_cast %82 : vector<8xf32> to vector<8x1xf32>
    %cst_32 = arith.constant 6.400000e+01 : f32
    %84 = vector.broadcast %cst_32 : f32 to vector<8x1xf32>
    %85 = arith.divf %83, %84 : vector<8x1xf32>
    %86 = vector.broadcast %85 : vector<8x1xf32> to vector<8x64xf32>
    %87 = arith.subf %81, %86 : vector<8x64xf32>
    %88 = arith.mulf %87, %87 : vector<8x64xf32>
    %cst_33 = arith.constant dense<0.000000e+00> : vector<8xf32>
    %89 = vector.multi_reduction <add>, %88, %cst_33 [1] : vector<8x64xf32> to vector<8xf32>
    %90 = vector.shape_cast %89 : vector<8xf32> to vector<8x1xf32>
    %cst_34 = arith.constant 6.400000e+01 : f32
    %91 = vector.broadcast %cst_34 : f32 to vector<8x1xf32>
    %92 = arith.divf %90, %91 : vector<8x1xf32>
    %93 = vector.broadcast %85 : vector<8x1xf32> to vector<8x64xf32>
    %94 = arith.subf %81, %93 : vector<8x64xf32>
    %cst_35 = arith.constant 9.99999974E-6 : f32
    %95 = vector.broadcast %cst_35 : f32 to vector<8x1xf32>
    %96 = arith.addf %92, %95 : vector<8x1xf32>
    %97 = math.rsqrt %96 : vector<8x1xf32>
    %98 = vector.broadcast %97 : vector<8x1xf32> to vector<8x64xf32>
    %99 = arith.mulf %94, %98 : vector<8x64xf32>
    %100 = vector.broadcast %5 : vector<1x64xf32> to vector<8x64xf32>
    %101 = arith.mulf %99, %100 : vector<8x64xf32>
    %102 = vector.broadcast %6 : vector<1x64xf32> to vector<8x64xf32>
    %103 = arith.addf %101, %102 : vector<8x64xf32>
    %104 = vector.shape_cast %103 : vector<8x64xf32> to vector<1x8x64xf32>
    %c0_36 = arith.constant 0 : index
    %c0_37 = arith.constant 0 : index
    %c0_38 = arith.constant 0 : index
    %105 = vector.load %arg7[%c0_36, %c0_37, %c0_38] : memref<1x8x64xf32, #tpu.memory_space<vmem>>, vector<1x8x64xf32>
    tpu.vector_store %arg7[%c0_36, %c0_37, %c0_38], %104 {strides = array<i32>} : memref<1x8x64xf32, #tpu.memory_space<vmem>>, vector<1x8x64xf32>,
    return
  }
  func.func @transform_0(%arg0: i32) -> (i32, i32, i32) {
    %c0_i32 = arith.constant 0 : i32
    %c0_i32_0 = arith.constant 0 : i32
    %c0_i32_1 = arith.constant 0 : i32
    return %arg0, %c0_i32, %c0_i32_0 : i32, i32, i32
  }
  func.func @transform_1(%arg0: i32) -> (i32, i32) {
    %c0_i32 = arith.constant 0 : i32
    %c0_i32_0 = arith.constant 0 : i32
    %c0_i32_1 = arith.constant 0 : i32
    return %c0_i32, %c0_i32_0 : i32, i32
  }
  func.func @transform_2(%arg0: i32) -> (i32, i32) {
    %c0_i32 = arith.constant 0 : i32
    %c0_i32_0 = arith.constant 0 : i32
    %c0_i32_1 = arith.constant 0 : i32
    return %c0_i32, %c0_i32_0 : i32, i32
  }
  func.func @transform_3(%arg0: i32) -> (i32, i32) {
    %c0_i32 = arith.constant 0 : i32
    %c0_i32_0 = arith.constant 0 : i32
    %c0_i32_1 = arith.constant 0 : i32
    return %c0_i32, %c0_i32_0 : i32, i32
  }
  func.func @transform_4(%arg0: i32) -> (i32, i32) {
    %c0_i32 = arith.constant 0 : i32
    %c0_i32_0 = arith.constant 0 : i32
    %c0_i32_1 = arith.constant 0 : i32
    return %c0_i32, %c0_i32_0 : i32, i32
  }
  func.func @transform_5(%arg0: i32) -> (i32, i32) {
    %c0_i32 = arith.constant 0 : i32
    %c0_i32_0 = arith.constant 0 : i32
    %c0_i32_1 = arith.constant 0 : i32
    return %c0_i32, %c0_i32_0 : i32, i32
  }
  func.func @transform_6(%arg0: i32) -> (i32, i32, i32) {
    %c0_i32 = arith.constant 0 : i32
    %c0_i32_0 = arith.constant 0 : i32
    %c0_i32_1 = arith.constant 0 : i32
    return %arg0, %c0_i32, %c0_i32_0 : i32, i32, i32
  }
}

</mosaic_0001>

<llo_original>
// kernel: tpu_custom_call.1
$region0: #{tpu_custom_call.1}
  #allocation0 [shape = 'u32[]', space=smem, size = 0x4, offset = 0x4, fixed_abs, tag = 'smem constant byte address 0x4 - core index']
  #allocation1 [shape = 'u32[144,128]{1,0:T(1,128)}', space=vmem, size = 0x12000, scoped, tag = 'internal scratch']
  %s0 = inlined_call_operand.hbm [shape: f32[2,8,64], index: 0, kind: input, shape index: {}]
  %s1 = inlined_call_operand.hbm [shape: f32[64,192], index: 1, kind: input, shape index: {}]
  %s2 = inlined_call_operand.hbm [shape: f32[64,64], index: 2, kind: input, shape index: {}]
  %s3 = inlined_call_operand.hbm [shape: f32[64,64], index: 3, kind: input, shape index: {}]
  %s4 = inlined_call_operand.hbm [shape: f32[64,64], index: 4, kind: input, shape index: {}]
  %s5 = inlined_call_operand.vmem [shape: f32[8,64], index: 5, kind: input, shape index: {}]
  %s6 = inlined_call_operand.hbm [shape: f32[2,8,64], index: 6, kind: output, shape index: {}]
  %s7 = sld [smem:[#allocation0]]
  $region77: #{tpu_custom_call.1} parent=0
    _
  %s9 = ssub.s32 1, %s7
  %s10 = scalar_select 0, %s9, %s7
  $region1: #{tpu_custom_call.1} parent=0
    #allocation2 [shape = 'u8[8192]{0}', space=vmem, size = 0x2000, scoped, tag = 'input window, operand 0']
    #allocation3 [shape = 's32[2]{0}', space=sflag, size = 0x8, scoped, tag = 'scoped memory for tpu_custom_call.1']
    #allocation4 [shape = 's32[2]{0}', space=sflag, size = 0x8, scoped, tag = 'scoped memory for tpu_custom_call.1']
    #allocation5 [shape = 'u8[65536]{0}', space=vmem, size = 0x10000, scoped, tag = 'input window, operand 1, single buffered']
    #allocation6 [shape = 's32[1]{0}', space=sflag, size = 0x4, scoped, tag = 'scoped memory for tpu_custom_call.1']
    #allocation7 [shape = 'u8[32768]{0}', space=vmem, size = 0x8000, scoped, tag = 'input window, operand 2, single buffered']
    #allocation8 [shape = 'u8[32768]{0}', space=vmem, size = 0x8000, scoped, tag = 'input window, operand 3, single buffered']
    #allocation9 [shape = 's32[1]{0}', space=sflag, size = 0x4, scoped, tag = 'scoped memory for tpu_custom_call.1']
    #allocation10 [shape = 'u8[32768]{0}', space=vmem, size = 0x8000, scoped, tag = 'input window, operand 4, single buffered']
    #allocation11 [shape = 'u8[8192]{0}', space=vmem, size = 0x2000, scoped, tag = 'output window, operand 0']
    %11 = vsyncpa [#allocation3], 0
    %s12 = scalar_lea.sflag [#allocation3], 1
    %13 = vsyncpa %s12, 0
    %14 = vsyncpa [#allocation6], 0
    %15 = vsyncpa [#allocation9], 0
    %16 = vsyncpa [#allocation4], 0
    %s17 = scalar_lea.sflag [#allocation4], 1
    %18 = vsyncpa %s17, 0
    loop: start=0, step=1, limit=4
    $region2: #{tpu_custom_call.1} parent=1 // loop_pre_header
      _
    $region3: #{tpu_custom_call.1} parent=1 // loop_header
      %s20 = sphi 0, %s24
      %p21 = scmp.ge.s32.totalorder %s20, 4
      %s30 = sphi 0, %s32
      %s33 = sphi 0, %s30
      %s34 = sphi 0, %s33
      %s50 = sphi 0, %s34
      %s54 = sphi 0, %s54
      %s56 = sphi 0, %s54
      %s57 = sphi 0, %s56
      %s71 = sphi 0, %s57
      %s75 = sphi 0, %s75
      %s77 = sphi 0, %s75
      %s78 = sphi 0, %s77
      %s92 = sphi 0, %s78
      %s96 = sphi 0, %s96
      %s98 = sphi 0, %s96
      %s99 = sphi 0, %s98
      %s113 = sphi 0, %s99
      %s117 = sphi 0, %s117
      %s119 = sphi 0, %s117
      %s120 = sphi 0, %s119
      %s134 = sphi 0, %s120
      %s138 = sphi 0, %s138
      %s140 = sphi 0, %s138
      %s141 = sphi 0, %s140
      %s155 = sphi 0, %s141
      %s161 = sphi 0, %s163
      %s164 = sphi 0, %s161
      %s165 = sphi 0, %s164
      %s181 = sphi 0, %s165
    $region4: #{tpu_custom_call.1} parent=1 // loop_header_branch
      %23 = sbr.rel (%p21) target = $region8
    $region5: #{tpu_custom_call.1} parent=1 // loop_body
      %s25 = ssub.s32 %s20, 1
      %s26 = ssub.s32 %s20, 2
      %s27 = sadd.s32 %s20, 1
      %s28 = ssub.s32 %s20, %s27
      %p29 = scmp.eq.s32.totalorder %s28, 0
      %s31 = sadd.s32 %s30, 1
      %s32 = scalar_select %p29, %s30, %s31
      %p35 = pneg %p29
      %p36 = scmp.eq.s32.totalorder %s20, 1
      %p37 = por %p35, %p36
      %p38 = scmp.ne.s32.totalorder %s30, %s33
      %p39 = scmp.eq.s32.totalorder %s20, 0
      %p40 = por %p38, %p39
      %p41 = scmp.ne.s32.totalorder %s30, %s33
      %p42 = scmp.eq.s32.totalorder %s25, 1
      %p43 = por %p41, %p42
      %p44 = scmp.ne.s32.totalorder %s33, %s34
      %p45 = scmp.eq.s32.totalorder %s25, 0
      %p46 = por %p44, %p45
      %p47 = scmp.ne.s32.totalorder %s33, %s34
      %p48 = scmp.eq.s32.totalorder %s26, 1
      %p49 = por %p47, %p48
      %p51 = scmp.ne.s32.totalorder %s34, %s50
      %p52 = scmp.eq.s32.totalorder %s26, 0
      %p53 = por %p51, %p52
      %s55 = sadd.s32 %s54, 1
      %p58 = scmp.eq.s32.totalorder %s20, 1
      %p59 = scmp.ne.s32.totalorder %s54, %s56
      %p60 = scmp.eq.s32.totalorder %s20, 0
      %p61 = por %p59, %p60
      %p62 = scmp.ne.s32.totalorder %s54, %s56
      %p63 = scmp.eq.s32.totalorder %s25, 1
      %p64 = por %p62, %p63
      %p65 = scmp.ne.s32.totalorder %s56, %s57
      %p66 = scmp.eq.s32.totalorder %s25, 0
      %p67 = por %p65, %p66
      %p68 = scmp.ne.s32.totalorder %s56, %s57
      %p69 = scmp.eq.s32.totalorder %s26, 1
      %p70 = por %p68, %p69
      %p72 = scmp.ne.s32.totalorder %s57, %s71
      %p73 = scmp.eq.s32.totalorder %s26, 0
      %p74 = por %p72, %p73
      %s76 = sadd.s32 %s75, 1
      %p79 = scmp.eq.s32.totalorder %s20, 1
      %p80 = scmp.ne.s32.totalorder %s75, %s77
      %p81 = scmp.eq.s32.totalorder %s20, 0
      %p82 = por %p80, %p81
      %p83 = scmp.ne.s32.totalorder %s75, %s77
      %p84 = scmp.eq.s32.totalorder %s25, 1
      %p85 = por %p83, %p84
      %p86 = scmp.ne.s32.totalorder %s77, %s78
      %p87 = scmp.eq.s32.totalorder %s25, 0
      %p88 = por %p86, %p87
      %p89 = scmp.ne.s32.totalorder %s77, %s78
      %p90 = scmp.eq.s32.totalorder %s26, 1
      %p91 = por %p89, %p90
      %p93 = scmp.ne.s32.totalorder %s78, %s92
      %p94 = scmp.eq.s32.totalorder %s26, 0
      %p95 = por %p93, %p94
      %s97 = sadd.s32 %s96, 1
      %p100 = scmp.eq.s32.totalorder %s20, 1
      %p101 = scmp.ne.s32.totalorder %s96, %s98
      %p102 = scmp.eq.s32.totalorder %s20, 0
      %p103 = por %p101, %p102
      %p104 = scmp.ne.s32.totalorder %s96, %s98
      %p105 = scmp.eq.s32.totalorder %s25, 1
      %p106 = por %p104, %p105
      %p107 = scmp.ne.s32.totalorder %s98, %s99
      %p108 = scmp.eq.s32.totalorder %s25, 0
      %p109 = por %p107, %p108
      %p110 = scmp.ne.s32.totalorder %s98, %s99
      %p111 = scmp.eq.s32.totalorder %s26, 1
      %p112 = por %p110, %p111
      %p114 = scmp.ne.s32.totalorder %s99, %s113
      %p115 = scmp.eq.s32.totalorder %s26, 0
      %p116 = por %p114, %p115
      %s118 = sadd.s32 %s117, 1
      %p121 = scmp.eq.s32.totalorder %s20, 1
      %p122 = scmp.ne.s32.totalorder %s117, %s119
      %p123 = scmp.eq.s32.totalorder %s20, 0
      %p124 = por %p122, %p123
      %p125 = scmp.ne.s32.totalorder %s117, %s119
      %p126 = scmp.eq.s32.totalorder %s25, 1
      %p127 = por %p125, %p126
      %p128 = scmp.ne.s32.totalorder %s119, %s120
      %p129 = scmp.eq.s32.totalorder %s25, 0
      %p130 = por %p128, %p129
      %p131 = scmp.ne.s32.totalorder %s119, %s120
      %p132 = scmp.eq.s32.totalorder %s26, 1
      %p133 = por %p131, %p132
      %p135 = scmp.ne.s32.totalorder %s120, %s134
      %p136 = scmp.eq.s32.totalorder %s26, 0
      %p137 = por %p135, %p136
      %s139 = sadd.s32 %s138, 1
      %p142 = scmp.eq.s32.totalorder %s20, 1
      %p143 = scmp.ne.s32.totalorder %s138, %s140
      %p144 = scmp.eq.s32.totalorder %s20, 0
      %p145 = por %p143, %p144
      %p146 = scmp.ne.s32.totalorder %s138, %s140
      %p147 = scmp.eq.s32.totalorder %s25, 1
      %p148 = por %p146, %p147
      %p149 = scmp.ne.s32.totalorder %s140, %s141
      %p150 = scmp.eq.s32.totalorder %s25, 0
      %p151 = por %p149, %p150
      %p152 = scmp.ne.s32.totalorder %s140, %s141
      %p153 = scmp.eq.s32.totalorder %s26, 1
      %p154 = por %p152, %p153
      %p156 = scmp.ne.s32.totalorder %s141, %s155
      %p157 = scmp.eq.s32.totalorder %s26, 0
      %p158 = por %p156, %p157
      %s159 = ssub.s32 %s20, %s27
      %p160 = scmp.eq.s32.totalorder %s159, 0
      %s162 = sadd.s32 %s161, 1
      %s163 = scalar_select %p160, %s161, %s162
      %p166 = pneg %p160
      %p167 = scmp.eq.s32.totalorder %s20, 1
      %p168 = por %p166, %p167
      %p169 = scmp.ne.s32.totalorder %s161, %s164
      %p170 = scmp.eq.s32.totalorder %s20, 0
      %p171 = por %p169, %p170
      %p172 = scmp.ne.s32.totalorder %s161, %s164
      %p173 = scmp.eq.s32.totalorder %s25, 1
      %p174 = por %p172, %p173
      %p175 = scmp.ne.s32.totalorder %s164, %s165
      %p176 = scmp.eq.s32.totalorder %s25, 0
      %p177 = por %p175, %p176
      %p178 = scmp.ne.s32.totalorder %s164, %s165
      %p179 = scmp.eq.s32.totalorder %s26, 1
      %p180 = por %p178, %p179
      %p182 = scmp.ne.s32.totalorder %s165, %s181
      %p183 = scmp.eq.s32.totalorder %s26, 0
      %p184 = por %p182, %p183
      %p185 = scmp.le.s32.totalorder 1, %s20
      %p186 = scmp.lt.s32.totalorder %s20, 3
      %p187 = pnand %p185, %p186
      %p188 = pneg %p187
      // Predicated region
      $region9: #{tpu_custom_call.1} parent=5 // pred_check
        _
      $region10: #{tpu_custom_call.1} parent=5 // pred_check_branch
        %190 = sbr.rel (%p187) target = $region12
      $region11: #{tpu_custom_call.1} parent=5 // pred_region
        %s191 = ssub.s32 %s20, 1
        // Predicated region
        $region13: #{tpu_custom_call.1} parent=11 // pred_check
          %p192 = pneg %p67
        $region14: #{tpu_custom_call.1} parent=11 // pred_check_branch
          %194 = sbr.rel (%p192) target = $region16
        $region15: #{tpu_custom_call.1} parent=11 // pred_region
          %s196 = ssub.s32 2048, 2048
          %197 = vsyncadd [#allocation6], %s196
          %s198 = sshll.u32 [#allocation5], 4
          %s199 = int_to_ptr.vmem [resolvable:$true] %s198
          %204 = dma.hbm_to_vmem [thread:$0]  %s1, 2048, %s199, [#allocation6], 256, 256, 16
        $region16: #{tpu_custom_call.1} parent=11 // pred_fallthru
          _
        // Predicated region
        $region17: #{tpu_custom_call.1} parent=11 // pred_check
          %p205 = pneg %p88
        $region18: #{tpu_custom_call.1} parent=11 // pred_check_branch
          %207 = sbr.rel (%p205) target = $region20
        $region19: #{tpu_custom_call.1} parent=11 // pred_region
          %s209 = ssub.s32 1024, 1024
          %210 = vsyncadd [#allocation6], %s209
          %s211 = sshll.u32 [#allocation7], 4
          %s212 = int_to_ptr.vmem [resolvable:$true] %s211
          %217 = dma.hbm_to_vmem [thread:$0]  %s2, 1024, %s212, [#allocation6], 128, 128, 8
        $region20: #{tpu_custom_call.1} parent=11 // pred_fallthru
          _
        // Predicated region
        $region21: #{tpu_custom_call.1} parent=11 // pred_check
          %p218 = pneg %p109
        $region22: #{tpu_custom_call.1} parent=11 // pred_check_branch
          %220 = sbr.rel (%p218) target = $region24
        $region23: #{tpu_custom_call.1} parent=11 // pred_region
          %s222 = ssub.s32 1024, 1024
          %223 = vsyncadd [#allocation9], %s222
          %s224 = sshll.u32 [#allocation8], 4
          %s225 = int_to_ptr.vmem [resolvable:$true] %s224
          %230 = dma.hbm_to_vmem [thread:$0]  %s3, 1024, %s225, [#allocation9], 128, 128, 8
        $region24: #{tpu_custom_call.1} parent=11 // pred_fallthru
          _
        // Predicated region
        $region25: #{tpu_custom_call.1} parent=11 // pred_check
          %p231 = pneg %p130
        $region26: #{tpu_custom_call.1} parent=11 // pred_check_branch
          %233 = sbr.rel (%p231) target = $region28
        $region27: #{tpu_custom_call.1} parent=11 // pred_region
          %s235 = ssub.s32 1024, 1024
          %236 = vsyncadd [#allocation9], %s235
          %s237 = sshll.u32 [#allocation10], 4
          %s238 = int_to_ptr.vmem [resolvable:$true] %s237
          %243 = dma.hbm_to_vmem [thread:$0]  %s4, 1024, %s238, [#allocation9], 128, 128, 8
        $region28: #{tpu_custom_call.1} parent=11 // pred_fallthru
          _
        // Predicated region
        $region29: #{tpu_custom_call.1} parent=11 // pred_check
          %p244 = pneg %p151
        $region30: #{tpu_custom_call.1} parent=11 // pred_check_branch
          %246 = sbr.rel (%p244) target = $region32
        $region31: #{tpu_custom_call.1} parent=11 // pred_region
          _
        $region32: #{tpu_custom_call.1} parent=11 // pred_fallthru
          _
      $region12: #{tpu_custom_call.1} parent=5 // pred_fallthru
        _
      %p247 = scmp.lt.s32.totalorder %s20, 2
      // Predicated region
      $region33: #{tpu_custom_call.1} parent=5 // pred_check
        %p248 = pneg %p247
      $region34: #{tpu_custom_call.1} parent=5 // pred_check_branch
        %250 = sbr.rel (%p248) target = $region36
      $region35: #{tpu_custom_call.1} parent=5 // pred_region
        // Predicated region
        $region37: #{tpu_custom_call.1} parent=35 // pred_check
          %p251 = pneg %p40
        $region38: #{tpu_custom_call.1} parent=35 // pred_check_branch
          %253 = sbr.rel (%p251) target = $region40
        $region39: #{tpu_custom_call.1} parent=35 // pred_region
          %s254 = sand.u32 %s30, 1
          %s255 = scalar_lea.sflag [#allocation3], %s254
          %s256 = sand.u32 %s30, 1
          %s257 = smul.addr %s256, 8
          %s258 = scalar_lea.vmem [#allocation2], %s257
          %s260 = ssub.s32 128, 128
          %261 = vsyncadd %s255, %s260
          %s262 = smul.addr %s20, 128
          %s263 = scalar_lea.hbm %s0, %s262
          %s265 = sshll.u32 %s258, 4
          %s266 = int_to_ptr.vmem [resolvable:$true] %s265
          %268 = dma.hbm_to_vmem [thread:$0]  %s263, 128, %s266, %s255
        $region40: #{tpu_custom_call.1} parent=35 // pred_fallthru
          _
      $region36: #{tpu_custom_call.1} parent=5 // pred_fallthru
        _
      %p269 = scmp.le.s32.totalorder 1, %s20
      %p270 = scmp.lt.s32.totalorder %s20, 3
      %p271 = pnand %p269, %p270
      %p272 = pneg %p271
      // Predicated region
      $region41: #{tpu_custom_call.1} parent=5 // pred_check
        _
      $region42: #{tpu_custom_call.1} parent=5 // pred_check_branch
        %274 = sbr.rel (%p271) target = $region44
      $region43: #{tpu_custom_call.1} parent=5 // pred_region
        %s275 = ssub.s32 %s20, 1
        %s276 = sand.u32 %s33, 1
        %s277 = scalar_lea.sflag [#allocation3], %s276
        %s278 = sand.u32 %s33, 1
        %s279 = smul.addr %s278, 8
        %s280 = scalar_lea.vmem [#allocation2], %s279
        // Predicated region
        $region45: #{tpu_custom_call.1} parent=43 // pred_check
          %p281 = pneg %p46
        $region46: #{tpu_custom_call.1} parent=43 // pred_check_branch
          %283 = sbr.rel (%p281) target = $region48
        $region47: #{tpu_custom_call.1} parent=43 // pred_region
          %284 = dma.done %s277, 128
        $region48: #{tpu_custom_call.1} parent=43 // pred_fallthru
          _
        // Predicated region
        $region49: #{tpu_custom_call.1} parent=43 // pred_check
          %p285 = pneg %p67
        $region50: #{tpu_custom_call.1} parent=43 // pred_check_branch
          %287 = sbr.rel (%p285) target = $region52
        $region51: #{tpu_custom_call.1} parent=43 // pred_region
          %288 = dma.done [#allocation6], 2048
        $region52: #{tpu_custom_call.1} parent=43 // pred_fallthru
          _
        // Predicated region
        $region53: #{tpu_custom_call.1} parent=43 // pred_check
          %p289 = pneg %p88
        $region54: #{tpu_custom_call.1} parent=43 // pred_check_branch
          %291 = sbr.rel (%p289) target = $region56
        $region55: #{tpu_custom_call.1} parent=43 // pred_region
          %292 = dma.done [#allocation6], 1024
        $region56: #{tpu_custom_call.1} parent=43 // pred_fallthru
          _
        // Predicated region
        $region57: #{tpu_custom_call.1} parent=43 // pred_check
          %p293 = pneg %p109
        $region58: #{tpu_custom_call.1} parent=43 // pred_check_branch
          %295 = sbr.rel (%p293) target = $region60
        $region59: #{tpu_custom_call.1} parent=43 // pred_region
          %296 = dma.done [#allocation9], 1024
        $region60: #{tpu_custom_call.1} parent=43 // pred_fallthru
          _
        // Predicated region
        $region61: #{tpu_custom_call.1} parent=43 // pred_check
          %p297 = pneg %p130
        $region62: #{tpu_custom_call.1} parent=43 // pred_check_branch
          %299 = sbr.rel (%p297) target = $region64
        $region63: #{tpu_custom_call.1} parent=43 // pred_region
          %300 = dma.done [#allocation9], 1024
        $region64: #{tpu_custom_call.1} parent=43 // pred_fallthru
          _
        %s301 = sand.u32 %s33, 1
        %s302 = scalar_lea.sflag [#allocation3], %s301
        %s303 = sand.u32 %s33, 1
        %s304 = smul.addr %s303, 8
        %s305 = scalar_lea.vmem [#allocation2], %s304
        %p306 = pneg %p46
        %p307 = pneg %p43
        %p308 = pneg %p67
        %p309 = pneg %p64
        %p310 = pneg %p88
        %p311 = pneg %p85
        %p312 = pneg %p109
        %p313 = pneg %p106
        %p314 = pneg %p130
        %p315 = pneg %p127
        %p316 = pneg %p151
        %p317 = pneg %p148
        %p318 = pneg %p177
        %p319 = pneg %p174
        %s320 = sand.u32 %s164, 1
        %s321 = scalar_lea.sflag [#allocation4], %s320
        %s322 = sand.u32 %s164, 1
        %s323 = smul.addr %s322, 8
        %s324 = scalar_lea.vmem [#allocation11], %s323
        %v325 = vld [vmem:[%s5] sm:$0x1]
        %v326 = vld [vmem:[%s5 + $0x1] sm:$0x1]
        %v327 = vld [vmem:[%s5 + $0x2] sm:$0x1]
        %v328 = vld [vmem:[%s5 + $0x3] sm:$0x1]
        %v329 = vld [vmem:[%s5 + $0x4] sm:$0x1]
        %v330 = vld [vmem:[%s5 + $0x5] sm:$0x1]
        %v331 = vld [vmem:[%s5 + $0x6] sm:$0x1]
        %v332 = vld [vmem:[%s280] sm:$0xff]
        %v333 = vld [vmem:[#allocation5] sm:$0xff]
        %v334 = vld [vmem:[#allocation5 + $0x8] sm:$0xff]
        %v335 = vld [vmem:[#allocation5 + $0x10] sm:$0xff]
        %v336 = vld [vmem:[#allocation5 + $0x18] sm:$0xff]
        %v337 = vld [vmem:[#allocation5 + $0x20] sm:$0xff]
        %v338 = vld [vmem:[#allocation5 + $0x28] sm:$0xff]
        %v339 = vld [vmem:[#allocation5 + $0x30] sm:$0xff]
        %v340 = vld [vmem:[#allocation5 + $0x38] sm:$0xff]
        %v341 = vld [vmem:[#allocation5 + $0x40] sm:$0xff]
        %v342 = vld [vmem:[#allocation5 + $0x48] sm:$0xff]
        %v343 = vld [vmem:[#allocation5 + $0x50] sm:$0xff]
        %v344 = vld [vmem:[#allocation5 + $0x58] sm:$0xff]
        %v345 = vld [vmem:[#allocation5 + $0x60] sm:$0xff]
        %v346 = vld [vmem:[#allocation5 + $0x68] sm:$0xff]
        %v347 = vld [vmem:[#allocation5 + $0x70] sm:$0xff]
        %v348 = vld [vmem:[#allocation5 + $0x78] sm:$0xff]
        %vm349 = vcmask 523264
        %v351 = vsel %vm349, %v332, 0
        %353 = vmatprep.subr.mxu0 %v334
        %354 = vmatpush1.msra.mxu0 %v333
        %355 = vmatprep.subr.mxu0 %v336
        %356 = vmatpush1.msra.mxu0 %v335
        %357 = vmatprep.subr.mxu0 %v338
        %358 = vmatpush1.msra.mxu0 %v337
        %359 = vmatprep.subr.mxu0 %v340
        %360 = vmatpush1.msra.mxu0 %v339
        %361 = vmatprep.subr.mxu0 %v342
        %362 = vmatpush1.msra.mxu0 %v341
        %363 = vmatprep.subr.mxu0 %v344
        %364 = vmatpush1.msra.mxu0 %v343
        %365 = vmatprep.subr.mxu0 %v346
        %366 = vmatpush1.msra.mxu0 %v345
        %367 = vmatprep.subr.mxu0 %v348
        %368 = vmatpush1.msra.mxu0 %v347
        %369 = vmatprep.subr.mxu0 0.0
        %370 = vmatpush1.msra.mxu0 0.0
        %371 = vmatprep.subr.mxu0 0.0
        %372 = vmatpush1.msra.mxu0 0.0
        %373 = vmatprep.subr.mxu0 0.0
        %374 = vmatpush1.msra.mxu0 0.0
        %375 = vmatprep.subr.mxu0 0.0
        %376 = vmatpush1.msra.mxu0 0.0
        %377 = vmatprep.subr.mxu0 0.0
        %378 = vmatpush1.msra.mxu0 0.0
        %379 = vmatprep.subr.mxu0 0.0
        %380 = vmatpush1.msra.mxu0 0.0
        %381 = vmatprep.subr.mxu0 0.0
        %382 = vmatpush1.msra.mxu0 0.0
        %383 = vmatprep.subr.mxu0 0.0
        %384 = vmatpush1.msra.mxu0 0.0
        %385 = vmatprep.subr.mxu0 0.0
        %386 = vmatpush1.msra.mxu0 0.0
        %387 = vmatprep.subr.mxu0 0.0
        %388 = vmatpush1.msra.mxu0 0.0
        %389 = vmatprep.subr.mxu0 0.0
        %390 = vmatpush1.msra.mxu0 0.0
        %391 = vmatprep.subr.mxu0 0.0
        %392 = vmatpush1.msra.mxu0 0.0
        %393 = vmatprep.subr.mxu0 0.0
        %394 = vmatpush1.msra.mxu0 0.0
        %395 = vmatprep.subr.mxu0 0.0
        %396 = vmatpush1.msra.mxu0 0.0
        %397 = vmatprep.subr.mxu0 0.0
        %398 = vmatpush1.msra.mxu0 0.0
        %399 = vmatprep.subr.mxu0 0.0
        %400 = vmatpush1.msra.mxu0 0.0
        %401 = vmatprep.subr.mxu0 0.0
        %402 = vmatpush1.msra.mxu0 0.0
        %403 = vmatprep.subr.mxu0 0.0
        %404 = vmatpush1.msra.mxu0 0.0
        %405 = vmatprep.subr.mxu0 0.0
        %406 = vmatpush1.msra.mxu0 0.0
        %407 = vmatprep.subr.mxu0 0.0
        %408 = vmatpush1.msra.mxu0 0.0
        %409 = vmatprep.subr.mxu0 0.0
        %410 = vmatpush1.msra.mxu0 0.0
        %411 = vmatprep.subr.mxu0 0.0
        %412 = vmatpush1.msra.mxu0 0.0
        %413 = vmatprep.subr.mxu0 0.0
        %414 = vmatpush1.msra.mxu0 0.0
        %415 = vmatprep.subr.mxu0 0.0
        %416 = vmatpush1.msra.mxu0 0.0
        %417 = vmatprep.mubr.f32.mxu0 0.0
        %418 = vmatmul.mubr.f32.gmra.mrb[0].mxu0 %v351
        %v419 = vpop.f32.mrb[0].mxu0
        %v420 = vadd.f32 0.0, %v419
        %v421 = vpop.f32.mrb[0].mxu0
        %v422 = vadd.f32 0.0, %v421
        %423 = vdwg.mxu0
        %425 = vrot.lane.b32.xlu0 %v420, 80
        %v426 = vpop.permute.xlu0 %425
        %428 = vrot.lane.b32.xlu0 %v420, 32
        %v429 = vpop.permute.xlu0 %428
        %430 = vrot.lane.b32.xlu0 %v422, 32
        %v431 = vpop.permute.xlu0 %430
        %vm432 = vcmask 261120
        %v433 = vsel %vm432, %v429, %v431
        %434 = vrot.lane.b32.xlu0 %v422, 112
        %v435 = vpop.permute.xlu0 %434
        %436 = vrot.lane.b32.xlu0 %v420, 112
        %v437 = vpop.permute.xlu0 %436
        %vm438 = vcmask 130048
        %v439 = vsel %vm438, %v420, 0
        %v441 = vsel %vm438, %v437, 0
        %443 = vmatprep.subr.mxu0 0.0
        %444 = vmatpush1.xpose.msra.mxu0 %v441
        %445 = vmatprep.subr.mxu0 0.0
        %446 = vmatpush1.xpose.msra.mxu0 0.0
        %447 = vmatprep.subr.mxu0 0.0
        %448 = vmatpush1.xpose.msra.mxu0 0.0
        %449 = vmatprep.subr.mxu0 0.0
        %450 = vmatpush1.xpose.msra.mxu0 0.0
        %451 = vmatprep.subr.mxu0 0.0
        %452 = vmatpush1.xpose.msra.mxu0 0.0
        %453 = vmatprep.subr.mxu0 0.0
        %454 = vmatpush1.xpose.msra.mxu0 0.0
        %455 = vmatprep.subr.mxu0 0.0
        %456 = vmatpush1.xpose.msra.mxu0 0.0
        %457 = vmatprep.subr.mxu0 0.0
        %458 = vmatpush1.xpose.msra.mxu0 0.0
        %459 = vmatprep.subr.mxu0 0.0
        %460 = vmatpush1.xpose.msra.mxu0 0.0
        %461 = vmatprep.subr.mxu0 0.0
        %462 = vmatpush1.xpose.msra.mxu0 0.0
        %463 = vmatprep.subr.mxu0 0.0
        %464 = vmatpush1.xpose.msra.mxu0 0.0
        %465 = vmatprep.subr.mxu0 0.0
        %466 = vmatpush1.xpose.msra.mxu0 0.0
        %467 = vmatprep.subr.mxu0 0.0
        %468 = vmatpush1.xpose.msra.mxu0 0.0
        %469 = vmatprep.subr.mxu0 0.0
        %470 = vmatpush1.xpose.msra.mxu0 0.0
        %471 = vmatprep.subr.mxu0 0.0
        %472 = vmatpush1.xpose.msra.mxu0 0.0
        %473 = vmatprep.subr.mxu0 0.0
        %474 = vmatpush1.xpose.msra.mxu0 0.0
        %475 = vmatprep.subr.mxu0 0.0
        %476 = vmatpush1.xpose.msra.mxu0 0.0
        %477 = vmatprep.subr.mxu0 0.0
        %478 = vmatpush1.xpose.msra.mxu0 0.0
        %479 = vmatprep.subr.mxu0 0.0
        %480 = vmatpush1.xpose.msra.mxu0 0.0
        %481 = vmatprep.subr.mxu0 0.0
        %482 = vmatpush1.xpose.msra.mxu0 0.0
        %483 = vmatprep.subr.mxu0 0.0
        %484 = vmatpush1.xpose.msra.mxu0 0.0
        %485 = vmatprep.subr.mxu0 0.0
        %486 = vmatpush1.xpose.msra.mxu0 0.0
        %487 = vmatprep.subr.mxu0 0.0
        %488 = vmatpush1.xpose.msra.mxu0 0.0
        %489 = vmatprep.subr.mxu0 0.0
        %490 = vmatpush1.xpose.msra.mxu0 0.0
        %491 = vmatprep.subr.mxu0 0.0
        %492 = vmatpush1.xpose.msra.mxu0 0.0
        %493 = vmatprep.subr.mxu0 0.0
        %494 = vmatpush1.xpose.msra.mxu0 0.0
        %495 = vmatprep.subr.mxu0 0.0
        %496 = vmatpush1.xpose.msra.mxu0 0.0
        %497 = vmatprep.subr.mxu0 0.0
        %498 = vmatpush1.xpose.msra.mxu0 0.0
        %499 = vmatprep.subr.mxu0 0.0
        %500 = vmatpush1.xpose.msra.mxu0 0.0
        %501 = vmatprep.subr.mxu0 0.0
        %502 = vmatpush1.xpose.msra.mxu0 0.0
        %503 = vmatprep.subr.mxu0 0.0
        %504 = vmatpush1.xpose.msra.mxu0 0.0
        %505 = vmatprep.subr.mxu0 0.0
        %506 = vmatpush1.xpose.msra.mxu0 0.0
        %507 = vmatprep.mubr.f32.mxu0 0.0
        %508 = vmatmul.mubr.f32.gmra.mrb[0].mxu0 %v439
        %v509 = vpop.f32.mrb[0].mxu0
        %v510 = vadd.f32 0.0, %v509
        %v511 = vpop.f32.mrb[0].mxu0
        %512 = vdwg.mxu0
        %513 = vrot.lane.b32.xlu0 %v426, 112
        %v514 = vpop.permute.xlu0 %513
        %v515 = vsel %vm438, %v426, 0
        %v517 = vsel %vm438, %v514, 0
        %519 = vmatprep.subr.mxu0 0.0
        %520 = vmatpush1.xpose.msra.mxu0 %v517
        %521 = vmatprep.subr.mxu0 0.0
        %522 = vmatpush1.xpose.msra.mxu0 0.0
        %523 = vmatprep.subr.mxu0 0.0
        %524 = vmatpush1.xpose.msra.mxu0 0.0
        %525 = vmatprep.subr.mxu0 0.0
        %526 = vmatpush1.xpose.msra.mxu0 0.0
        %527 = vmatprep.subr.mxu0 0.0
        %528 = vmatpush1.xpose.msra.mxu0 0.0
        %529 = vmatprep.subr.mxu0 0.0
        %530 = vmatpush1.xpose.msra.mxu0 0.0
        %531 = vmatprep.subr.mxu0 0.0
        %532 = vmatpush1.xpose.msra.mxu0 0.0
        %533 = vmatprep.subr.mxu0 0.0
        %534 = vmatpush1.xpose.msra.mxu0 0.0
        %535 = vmatprep.subr.mxu0 0.0
        %536 = vmatpush1.xpose.msra.mxu0 0.0
        %537 = vmatprep.subr.mxu0 0.0
        %538 = vmatpush1.xpose.msra.mxu0 0.0
        %539 = vmatprep.subr.mxu0 0.0
        %540 = vmatpush1.xpose.msra.mxu0 0.0
        %541 = vmatprep.subr.mxu0 0.0
        %542 = vmatpush1.xpose.msra.mxu0 0.0
        %543 = vmatprep.subr.mxu0 0.0
        %544 = vmatpush1.xpose.msra.mxu0 0.0
        %545 = vmatprep.subr.mxu0 0.0
        %546 = vmatpush1.xpose.msra.mxu0 0.0
        %547 = vmatprep.subr.mxu0 0.0
        %548 = vmatpush1.xpose.msra.mxu0 0.0
        %549 = vmatprep.subr.mxu0 0.0
        %550 = vmatpush1.xpose.msra.mxu0 0.0
        %551 = vmatprep.subr.mxu0 0.0
        %552 = vmatpush1.xpose.msra.mxu0 0.0
        %553 = vmatprep.subr.mxu0 0.0
        %554 = vmatpush1.xpose.msra.mxu0 0.0
        %555 = vmatprep.subr.mxu0 0.0
        %556 = vmatpush1.xpose.msra.mxu0 0.0
        %557 = vmatprep.subr.mxu0 0.0
        %558 = vmatpush1.xpose.msra.mxu0 0.0
        %559 = vmatprep.subr.mxu0 0.0
        %560 = vmatpush1.xpose.msra.mxu0 0.0
        %561 = vmatprep.subr.mxu0 0.0
        %562 = vmatpush1.xpose.msra.mxu0 0.0
        %563 = vmatprep.subr.mxu0 0.0
        %564 = vmatpush1.xpose.msra.mxu0 0.0
        %565 = vmatprep.subr.mxu0 0.0
        %566 = vmatpush1.xpose.msra.mxu0 0.0
        %567 = vmatprep.subr.mxu0 0.0
        %568 = vmatpush1.xpose.msra.mxu0 0.0
        %569 = vmatprep.subr.mxu0 0.0
        %570 = vmatpush1.xpose.msra.mxu0 0.0
        %571 = vmatprep.subr.mxu0 0.0
        %572 = vmatpush1.xpose.msra.mxu0 0.0
        %573 = vmatprep.subr.mxu0 0.0
        %574 = vmatpush1.xpose.msra.mxu0 0.0
        %575 = vmatprep.subr.mxu0 0.0
        %576 = vmatpush1.xpose.msra.mxu0 0.0
        %577 = vmatprep.subr.mxu0 0.0
        %578 = vmatpush1.xpose.msra.mxu0 0.0
        %579 = vmatprep.subr.mxu0 0.0
        %580 = vmatpush1.xpose.msra.mxu0 0.0
        %581 = vmatprep.subr.mxu0 0.0
        %582 = vmatpush1.xpose.msra.mxu0 0.0
        %583 = vmatprep.mubr.f32.mxu0 0.0
        %584 = vmatmul.mubr.f32.gmra.mrb[0].mxu0 %v515
        %v585 = vpop.f32.mrb[0].mxu0
        %v586 = vadd.f32 0.0, %v585
        %v587 = vpop.f32.mrb[0].mxu0
        %588 = vdwg.mxu0
        %589 = vrot.lane.b32.xlu0 %v433, 112
        %v590 = vpop.permute.xlu0 %589
        %v591 = vsel %vm438, %v433, 0
        %v593 = vsel %vm438, %v590, 0
        %595 = vmatprep.subr.mxu0 0.0
        %596 = vmatpush1.xpose.msra.mxu0 %v593
        %597 = vmatprep.subr.mxu0 0.0
        %598 = vmatpush1.xpose.msra.mxu0 0.0
        %599 = vmatprep.subr.mxu0 0.0
        %600 = vmatpush1.xpose.msra.mxu0 0.0
        %601 = vmatprep.subr.mxu0 0.0
        %602 = vmatpush1.xpose.msra.mxu0 0.0
        %603 = vmatprep.subr.mxu0 0.0
        %604 = vmatpush1.xpose.msra.mxu0 0.0
        %605 = vmatprep.subr.mxu0 0.0
        %606 = vmatpush1.xpose.msra.mxu0 0.0
        %607 = vmatprep.subr.mxu0 0.0
        %608 = vmatpush1.xpose.msra.mxu0 0.0
        %609 = vmatprep.subr.mxu0 0.0
        %610 = vmatpush1.xpose.msra.mxu0 0.0
        %611 = vmatprep.subr.mxu0 0.0
        %612 = vmatpush1.xpose.msra.mxu0 0.0
        %613 = vmatprep.subr.mxu0 0.0
        %614 = vmatpush1.xpose.msra.mxu0 0.0
        %615 = vmatprep.subr.mxu0 0.0
        %616 = vmatpush1.xpose.msra.mxu0 0.0
        %617 = vmatprep.subr.mxu0 0.0
        %618 = vmatpush1.xpose.msra.mxu0 0.0
        %619 = vmatprep.subr.mxu0 0.0
        %620 = vmatpush1.xpose.msra.mxu0 0.0
        %621 = vmatprep.subr.mxu0 0.0
        %622 = vmatpush1.xpose.msra.mxu0 0.0
        %623 = vmatprep.subr.mxu0 0.0
        %624 = vmatpush1.xpose.msra.mxu0 0.0
        %625 = vmatprep.subr.mxu0 0.0
        %626 = vmatpush1.xpose.msra.mxu0 0.0
        %627 = vmatprep.subr.mxu0 0.0
        %628 = vmatpush1.xpose.msra.mxu0 0.0
        %629 = vmatprep.subr.mxu0 0.0
        %630 = vmatpush1.xpose.msra.mxu0 0.0
        %631 = vmatprep.subr.mxu0 0.0
        %632 = vmatpush1.xpose.msra.mxu0 0.0
        %633 = vmatprep.subr.mxu0 0.0
        %634 = vmatpush1.xpose.msra.mxu0 0.0
        %635 = vmatprep.subr.mxu0 0.0
        %636 = vmatpush1.xpose.msra.mxu0 0.0
        %637 = vmatprep.subr.mxu0 0.0
        %638 = vmatpush1.xpose.msra.mxu0 0.0
        %639 = vmatprep.subr.mxu0 0.0
        %640 = vmatpush1.xpose.msra.mxu0 0.0
        %641 = vmatprep.subr.mxu0 0.0
        %642 = vmatpush1.xpose.msra.mxu0 0.0
        %643 = vmatprep.subr.mxu0 0.0
        %644 = vmatpush1.xpose.msra.mxu0 0.0
        %645 = vmatprep.subr.mxu0 0.0
        %646 = vmatpush1.xpose.msra.mxu0 0.0
        %647 = vmatprep.subr.mxu0 0.0
        %648 = vmatpush1.xpose.msra.mxu0 0.0
        %649 = vmatprep.subr.mxu0 0.0
        %650 = vmatpush1.xpose.msra.mxu0 0.0
        %651 = vmatprep.subr.mxu0 0.0
        %652 = vmatpush1.xpose.msra.mxu0 0.0
        %653 = vmatprep.subr.mxu0 0.0
        %654 = vmatpush1.xpose.msra.mxu0 0.0
        %655 = vmatprep.subr.mxu0 0.0
        %656 = vmatpush1.xpose.msra.mxu0 0.0
        %657 = vmatprep.subr.mxu0 0.0
        %658 = vmatpush1.xpose.msra.mxu0 0.0
        %659 = vmatprep.mubr.f32.mxu0 0.0
        %660 = vmatmul.mubr.f32.gmra.mrb[0].mxu0 %v591
        %v661 = vpop.f32.mrb[0].mxu0
        %v662 = vadd.f32 0.0, %v661
        %v663 = vpop.f32.mrb[0].mxu0
        %664 = vdwg.mxu0
        %665 = vrot.lane.b32.xlu0 %v435, 112
        %v666 = vpop.permute.xlu0 %665
        %v667 = vsel %vm438, %v435, 0
        %v669 = vsel %vm438, %v666, 0
        %671 = vmatprep.subr.mxu0 0.0
        %672 = vmatpush1.xpose.msra.mxu0 %v669
        %673 = vmatprep.subr.mxu0 0.0
        %674 = vmatpush1.xpose.msra.mxu0 0.0
        %675 = vmatprep.subr.mxu0 0.0
        %676 = vmatpush1.xpose.msra.mxu0 0.0
        %677 = vmatprep.subr.mxu0 0.0
        %678 = vmatpush1.xpose.msra.mxu0 0.0
        %679 = vmatprep.subr.mxu0 0.0
        %680 = vmatpush1.xpose.msra.mxu0 0.0
        %681 = vmatprep.subr.mxu0 0.0
        %682 = vmatpush1.xpose.msra.mxu0 0.0
        %683 = vmatprep.subr.mxu0 0.0
        %684 = vmatpush1.xpose.msra.mxu0 0.0
        %685 = vmatprep.subr.mxu0 0.0
        %686 = vmatpush1.xpose.msra.mxu0 0.0
        %687 = vmatprep.subr.mxu0 0.0
        %688 = vmatpush1.xpose.msra.mxu0 0.0
        %689 = vmatprep.subr.mxu0 0.0
        %690 = vmatpush1.xpose.msra.mxu0 0.0
        %691 = vmatprep.subr.mxu0 0.0
        %692 = vmatpush1.xpose.msra.mxu0 0.0
        %693 = vmatprep.subr.mxu0 0.0
        %694 = vmatpush1.xpose.msra.mxu0 0.0
        %695 = vmatprep.subr.mxu0 0.0
        %696 = vmatpush1.xpose.msra.mxu0 0.0
        %697 = vmatprep.subr.mxu0 0.0
        %698 = vmatpush1.xpose.msra.mxu0 0.0
        %699 = vmatprep.subr.mxu0 0.0
        %700 = vmatpush1.xpose.msra.mxu0 0.0
        %701 = vmatprep.subr.mxu0 0.0
        %702 = vmatpush1.xpose.msra.mxu0 0.0
        %703 = vmatprep.subr.mxu0 0.0
        %704 = vmatpush1.xpose.msra.mxu0 0.0
        %705 = vmatprep.subr.mxu0 0.0
        %706 = vmatpush1.xpose.msra.mxu0 0.0
        %707 = vmatprep.subr.mxu0 0.0
        %708 = vmatpush1.xpose.msra.mxu0 0.0
        %709 = vmatprep.subr.mxu0 0.0
        %710 = vmatpush1.xpose.msra.mxu0 0.0
        %711 = vmatprep.subr.mxu0 0.0
        %712 = vmatpush1.xpose.msra.mxu0 0.0
        %713 = vmatprep.subr.mxu0 0.0
        %714 = vmatpush1.xpose.msra.mxu0 0.0
        %715 = vmatprep.subr.mxu0 0.0
        %716 = vmatpush1.xpose.msra.mxu0 0.0
        %717 = vmatprep.subr.mxu0 0.0
        %718 = vmatpush1.xpose.msra.mxu0 0.0
        %719 = vmatprep.subr.mxu0 0.0
        %720 = vmatpush1.xpose.msra.mxu0 0.0
        %721 = vmatprep.subr.mxu0 0.0
        %722 = vmatpush1.xpose.msra.mxu0 0.0
        %723 = vmatprep.subr.mxu0 0.0
        %724 = vmatpush1.xpose.msra.mxu0 0.0
        %725 = vmatprep.subr.mxu0 0.0
        %726 = vmatpush1.xpose.msra.mxu0 0.0
        %727 = vmatprep.subr.mxu0 0.0
        %728 = vmatpush1.xpose.msra.mxu0 0.0
        %729 = vmatprep.subr.mxu0 0.0
        %730 = vmatpush1.xpose.msra.mxu0 0.0
        %731 = vmatprep.subr.mxu0 0.0
        %732 = vmatpush1.xpose.msra.mxu0 0.0
        %733 = vmatprep.subr.mxu0 0.0
        %734 = vmatpush1.xpose.msra.mxu0 0.0
        %735 = vmatprep.mubr.f32.mxu0 0.0
        %736 = vmatmul.mubr.f32.gmra.mrb[0].mxu0 %v667
        %v737 = vpop.f32.mrb[0].mxu0
        %v738 = vadd.f32 0.0, %v737
        %v739 = vpop.f32.mrb[0].mxu0
        %740 = vdwg.mxu0
        %vm741 = vcmask 64512
        %v742 = vsel %vm741, %v510, -inf
        %743 = vmax.xlane.f32.xlu0 %v742
        %v744 = vpop.xlane.xlu0 %743
        %v745 = vsel %vm741, %v586, -inf
        %746 = vmax.xlane.f32.xlu0 %v745
        %v747 = vpop.xlane.xlu0 %746
        %v748 = vsel %vm741, %v662, -inf
        %749 = vmax.xlane.f32.xlu0 %v748
        %v750 = vpop.xlane.xlu0 %749
        %v751 = vsel %vm741, %v738, -inf
        %752 = vmax.xlane.f32.xlu0 %v751
        %v753 = vpop.xlane.xlu0 %752
        %v754 = vsub.f32 %v510, %v744
        %v755 = vsub.f32 %v586, %v747
        %v756 = vsub.f32 %v662, %v750
        %v757 = vsub.f32 %v738, %v753
        %v758 = vmul.f32 %v754, 1.442695
        %v759 = vpow.pop %v758
        %v760 = vmul.f32 %v755, 1.442695
        %v761 = vpow.pop %v760
        %v762 = vmul.f32 %v756, 1.442695
        %v763 = vpow.pop %v762
        %v764 = vmul.f32 %v757, 1.442695
        %v765 = vpow.pop %v764
        %v766 = vsel %vm741, %v759, 0.0
        %767 = vadd.xlane.f32.xlu0 %v766
        %v768 = vpop.xlane.xlu0 %767
        %v769 = vsel %vm741, %v761, 0.0
        %770 = vadd.xlane.f32.xlu0 %v769
        %v771 = vpop.xlane.xlu0 %770
        %v772 = vsel %vm741, %v763, 0.0
        %773 = vadd.xlane.f32.xlu0 %v772
        %v774 = vpop.xlane.xlu0 %773
        %v775 = vsel %vm741, %v765, 0.0
        %776 = vadd.xlane.f32.xlu0 %v775
        %v777 = vpop.xlane.xlu0 %776
        %v778 = vrcp.pop %v768
        %v779 = vrcp.pop %v771
        %v780 = vrcp.pop %v774
        %v781 = vrcp.pop %v777
        %v782 = vmul.f32 %v759, %v778
        %v783 = vmul.f32 %v761, %v779
        %v784 = vmul.f32 %v763, %v780
        %v785 = vmul.f32 %v765, %v781
        %786 = vrot.lane.b32.xlu0 %v420, 96
        %v787 = vpop.permute.xlu0 %786
        %v790 = vsel %vm741, %v782, 0
        %792 = vmatprep.subr.mxu0 0.0
        %793 = vmatpush1.msra.mxu0 %v787
        %794 = vmatprep.subr.mxu0 0.0
        %795 = vmatpush1.msra.mxu0 0.0
        %796 = vmatprep.subr.mxu0 0.0
        %797 = vmatpush1.msra.mxu0 0.0
        %798 = vmatprep.subr.mxu0 0.0
        %799 = vmatpush1.msra.mxu0 0.0
        %800 = vmatprep.subr.mxu0 0.0
        %801 = vmatpush1.msra.mxu0 0.0
        %802 = vmatprep.subr.mxu0 0.0
        %803 = vmatpush1.msra.mxu0 0.0
        %804 = vmatprep.subr.mxu0 0.0
        %805 = vmatpush1.msra.mxu0 0.0
        %806 = vmatprep.subr.mxu0 0.0
        %807 = vmatpush1.msra.mxu0 0.0
        %808 = vmatprep.subr.mxu0 0.0
        %809 = vmatpush1.msra.mxu0 0.0
        %810 = vmatprep.subr.mxu0 0.0
        %811 = vmatpush1.msra.mxu0 0.0
        %812 = vmatprep.subr.mxu0 0.0
        %813 = vmatpush1.msra.mxu0 0.0
        %814 = vmatprep.subr.mxu0 0.0
        %815 = vmatpush1.msra.mxu0 0.0
        %816 = vmatprep.subr.mxu0 0.0
        %817 = vmatpush1.msra.mxu0 0.0
        %818 = vmatprep.subr.mxu0 0.0
        %819 = vmatpush1.msra.mxu0 0.0
        %820 = vmatprep.subr.mxu0 0.0
        %821 = vmatpush1.msra.mxu0 0.0
        %822 = vmatprep.subr.mxu0 0.0
        %823 = vmatpush1.msra.mxu0 0.0
        %824 = vmatprep.subr.mxu0 0.0
        %825 = vmatpush1.msra.mxu0 0.0
        %826 = vmatprep.subr.mxu0 0.0
        %827 = vmatpush1.msra.mxu0 0.0
        %828 = vmatprep.subr.mxu0 0.0
        %829 = vmatpush1.msra.mxu0 0.0
        %830 = vmatprep.subr.mxu0 0.0
        %831 = vmatpush1.msra.mxu0 0.0
        %832 = vmatprep.subr.mxu0 0.0
        %833 = vmatpush1.msra.mxu0 0.0
        %834 = vmatprep.subr.mxu0 0.0
        %835 = vmatpush1.msra.mxu0 0.0
        %836 = vmatprep.subr.mxu0 0.0
        %837 = vmatpush1.msra.mxu0 0.0
        %838 = vmatprep.subr.mxu0 0.0
        %839 = vmatpush1.msra.mxu0 0.0
        %840 = vmatprep.subr.mxu0 0.0
        %841 = vmatpush1.msra.mxu0 0.0
        %842 = vmatprep.subr.mxu0 0.0
        %843 = vmatpush1.msra.mxu0 0.0
        %844 = vmatprep.subr.mxu0 0.0
        %845 = vmatpush1.msra.mxu0 0.0
        %846 = vmatprep.subr.mxu0 0.0
        %847 = vmatpush1.msra.mxu0 0.0
        %848 = vmatprep.subr.mxu0 0.0
        %849 = vmatpush1.msra.mxu0 0.0
        %850 = vmatprep.subr.mxu0 0.0
        %851 = vmatpush1.msra.mxu0 0.0
        %852 = vmatprep.subr.mxu0 0.0
        %853 = vmatpush1.msra.mxu0 0.0
        %854 = vmatprep.subr.mxu0 0.0
        %855 = vmatpush1.msra.mxu0 0.0
        %856 = vmatprep.mubr.f32.mxu0 0.0
        %857 = vmatmul.mubr.f32.gmra.mrb[0].mxu0 %v790
        %v858 = vpop.f32.mrb[0].mxu0
        %v859 = vadd.f32 0.0, %v858
        %v860 = vpop.f32.mrb[0].mxu0
        %861 = vdwg.mxu0
        %862 = vrot.lane.b32.xlu0 %v426, 96
        %v863 = vpop.permute.xlu0 %862
        %v866 = vsel %vm741, %v783, 0
        %868 = vmatprep.subr.mxu0 0.0
        %869 = vmatpush1.msra.mxu0 %v863
        %870 = vmatprep.subr.mxu0 0.0
        %871 = vmatpush1.msra.mxu0 0.0
        %872 = vmatprep.subr.mxu0 0.0
        %873 = vmatpush1.msra.mxu0 0.0
        %874 = vmatprep.subr.mxu0 0.0
        %875 = vmatpush1.msra.mxu0 0.0
        %876 = vmatprep.subr.mxu0 0.0
        %877 = vmatpush1.msra.mxu0 0.0
        %878 = vmatprep.subr.mxu0 0.0
        %879 = vmatpush1.msra.mxu0 0.0
        %880 = vmatprep.subr.mxu0 0.0
        %881 = vmatpush1.msra.mxu0 0.0
        %882 = vmatprep.subr.mxu0 0.0
        %883 = vmatpush1.msra.mxu0 0.0
        %884 = vmatprep.subr.mxu0 0.0
        %885 = vmatpush1.msra.mxu0 0.0
        %886 = vmatprep.subr.mxu0 0.0
        %887 = vmatpush1.msra.mxu0 0.0
        %888 = vmatprep.subr.mxu0 0.0
        %889 = vmatpush1.msra.mxu0 0.0
        %890 = vmatprep.subr.mxu0 0.0
        %891 = vmatpush1.msra.mxu0 0.0
        %892 = vmatprep.subr.mxu0 0.0
        %893 = vmatpush1.msra.mxu0 0.0
        %894 = vmatprep.subr.mxu0 0.0
        %895 = vmatpush1.msra.mxu0 0.0
        %896 = vmatprep.subr.mxu0 0.0
        %897 = vmatpush1.msra.mxu0 0.0
        %898 = vmatprep.subr.mxu0 0.0
        %899 = vmatpush1.msra.mxu0 0.0
        %900 = vmatprep.subr.mxu0 0.0
        %901 = vmatpush1.msra.mxu0 0.0
        %902 = vmatprep.subr.mxu0 0.0
        %903 = vmatpush1.msra.mxu0 0.0
        %904 = vmatprep.subr.mxu0 0.0
        %905 = vmatpush1.msra.mxu0 0.0
        %906 = vmatprep.subr.mxu0 0.0
        %907 = vmatpush1.msra.mxu0 0.0
        %908 = vmatprep.subr.mxu0 0.0
        %909 = vmatpush1.msra.mxu0 0.0
        %910 = vmatprep.subr.mxu0 0.0
        %911 = vmatpush1.msra.mxu0 0.0
        %912 = vmatprep.subr.mxu0 0.0
        %913 = vmatpush1.msra.mxu0 0.0
        %914 = vmatprep.subr.mxu0 0.0
        %915 = vmatpush1.msra.mxu0 0.0
        %916 = vmatprep.subr.mxu0 0.0
        %917 = vmatpush1.msra.mxu0 0.0
        %918 = vmatprep.subr.mxu0 0.0
        %919 = vmatpush1.msra.mxu0 0.0
        %920 = vmatprep.subr.mxu0 0.0
        %921 = vmatpush1.msra.mxu0 0.0
        %922 = vmatprep.subr.mxu0 0.0
        %923 = vmatpush1.msra.mxu0 0.0
        %924 = vmatprep.subr.mxu0 0.0
        %925 = vmatpush1.msra.mxu0 0.0
        %926 = vmatprep.subr.mxu0 0.0
        %927 = vmatpush1.msra.mxu0 0.0
        %928 = vmatprep.subr.mxu0 0.0
        %929 = vmatpush1.msra.mxu0 0.0
        %930 = vmatprep.subr.mxu0 0.0
        %931 = vmatpush1.msra.mxu0 0.0
        %932 = vmatprep.mubr.f32.mxu0 0.0
        %933 = vmatmul.mubr.f32.gmra.mrb[0].mxu0 %v866
        %v934 = vpop.f32.mrb[0].mxu0
        %v935 = vadd.f32 0.0, %v934
        %v936 = vpop.f32.mrb[0].mxu0
        %937 = vdwg.mxu0
        %938 = vrot.lane.b32.xlu0 %v433, 96
        %v939 = vpop.permute.xlu0 %938
        %v942 = vsel %vm741, %v784, 0
        %944 = vmatprep.subr.mxu0 0.0
        %945 = vmatpush1.msra.mxu0 %v939
        %946 = vmatprep.subr.mxu0 0.0
        %947 = vmatpush1.msra.mxu0 0.0
        %948 = vmatprep.subr.mxu0 0.0
        %949 = vmatpush1.msra.mxu0 0.0
        %950 = vmatprep.subr.mxu0 0.0
        %951 = vmatpush1.msra.mxu0 0.0
        %952 = vmatprep.subr.mxu0 0.0
        %953 = vmatpush1.msra.mxu0 0.0
        %954 = vmatprep.subr.mxu0 0.0
        %955 = vmatpush1.msra.mxu0 0.0
        %956 = vmatprep.subr.mxu0 0.0
        %957 = vmatpush1.msra.mxu0 0.0
        %958 = vmatprep.subr.mxu0 0.0
        %959 = vmatpush1.msra.mxu0 0.0
        %960 = vmatprep.subr.mxu0 0.0
        %961 = vmatpush1.msra.mxu0 0.0
        %962 = vmatprep.subr.mxu0 0.0
        %963 = vmatpush1.msra.mxu0 0.0
        %964 = vmatprep.subr.mxu0 0.0
        %965 = vmatpush1.msra.mxu0 0.0
        %966 = vmatprep.subr.mxu0 0.0
        %967 = vmatpush1.msra.mxu0 0.0
        %968 = vmatprep.subr.mxu0 0.0
        %969 = vmatpush1.msra.mxu0 0.0
        %970 = vmatprep.subr.mxu0 0.0
        %971 = vmatpush1.msra.mxu0 0.0
        %972 = vmatprep.subr.mxu0 0.0
        %973 = vmatpush1.msra.mxu0 0.0
        %974 = vmatprep.subr.mxu0 0.0
        %975 = vmatpush1.msra.mxu0 0.0
        %976 = vmatprep.subr.mxu0 0.0
        %977 = vmatpush1.msra.mxu0 0.0
        %978 = vmatprep.subr.mxu0 0.0
        %979 = vmatpush1.msra.mxu0 0.0
        %980 = vmatprep.subr.mxu0 0.0
        %981 = vmatpush1.msra.mxu0 0.0
        %982 = vmatprep.subr.mxu0 0.0
        %983 = vmatpush1.msra.mxu0 0.0
        %984 = vmatprep.subr.mxu0 0.0
        %985 = vmatpush1.msra.mxu0 0.0
        %986 = vmatprep.subr.mxu0 0.0
        %987 = vmatpush1.msra.mxu0 0.0
        %988 = vmatprep.subr.mxu0 0.0
        %989 = vmatpush1.msra.mxu0 0.0
        %990 = vmatprep.subr.mxu0 0.0
        %991 = vmatpush1.msra.mxu0 0.0
        %992 = vmatprep.subr.mxu0 0.0
        %993 = vmatpush1.msra.mxu0 0.0
        %994 = vmatprep.subr.mxu0 0.0
        %995 = vmatpush1.msra.mxu0 0.0
        %996 = vmatprep.subr.mxu0 0.0
        %997 = vmatpush1.msra.mxu0 0.0
        %998 = vmatprep.subr.mxu0 0.0
        %999 = vmatpush1.msra.mxu0 0.0
        %1000 = vmatprep.subr.mxu0 0.0
        %1001 = vmatpush1.msra.mxu0 0.0
        %1002 = vmatprep.subr.mxu0 0.0
        %1003 = vmatpush1.msra.mxu0 0.0
        %1004 = vmatprep.subr.mxu0 0.0
        %1005 = vmatpush1.msra.mxu0 0.0
        %1006 = vmatprep.subr.mxu0 0.0
        %1007 = vmatpush1.msra.mxu0 0.0
        %1008 = vmatprep.mubr.f32.mxu0 0.0
        %1009 = vmatmul.mubr.f32.gmra.mrb[0].mxu0 %v942
        %v1010 = vpop.f32.mrb[0].mxu0
        %v1011 = vadd.f32 0.0, %v1010
        %v1012 = vpop.f32.mrb[0].mxu0
        %1013 = vdwg.mxu0
        %1014 = vrot.lane.b32.xlu0 %v435, 96
        %v1015 = vpop.permute.xlu0 %1014
        %v1018 = vsel %vm741, %v785, 0
        %1020 = vmatprep.subr.mxu0 0.0
        %1021 = vmatpush1.msra.mxu0 %v1015
        %1022 = vmatprep.subr.mxu0 0.0
        %1023 = vmatpush1.msra.mxu0 0.0
        %1024 = vmatprep.subr.mxu0 0.0
        %1025 = vmatpush1.msra.mxu0 0.0
        %1026 = vmatprep.subr.mxu0 0.0
        %1027 = vmatpush1.msra.mxu0 0.0
        %1028 = vmatprep.subr.mxu0 0.0
        %1029 = vmatpush1.msra.mxu0 0.0
        %1030 = vmatprep.subr.mxu0 0.0
        %1031 = vmatpush1.msra.mxu0 0.0
        %1032 = vmatprep.subr.mxu0 0.0
        %1033 = vmatpush1.msra.mxu0 0.0
        %1034 = vmatprep.subr.mxu0 0.0
        %1035 = vmatpush1.msra.mxu0 0.0
        %1036 = vmatprep.subr.mxu0 0.0
        %1037 = vmatpush1.msra.mxu0 0.0
        %1038 = vmatprep.subr.mxu0 0.0
        %1039 = vmatpush1.msra.mxu0 0.0
        %1040 = vmatprep.subr.mxu0 0.0
        %1041 = vmatpush1.msra.mxu0 0.0
        %1042 = vmatprep.subr.mxu0 0.0
        %1043 = vmatpush1.msra.mxu0 0.0
        %1044 = vmatprep.subr.mxu0 0.0
        %1045 = vmatpush1.msra.mxu0 0.0
        %1046 = vmatprep.subr.mxu0 0.0
        %1047 = vmatpush1.msra.mxu0 0.0
        %1048 = vmatprep.subr.mxu0 0.0
        %1049 = vmatpush1.msra.mxu0 0.0
        %1050 = vmatprep.subr.mxu0 0.0
        %1051 = vmatpush1.msra.mxu0 0.0
        %1052 = vmatprep.subr.mxu0 0.0
        %1053 = vmatpush1.msra.mxu0 0.0
        %1054 = vmatprep.subr.mxu0 0.0
        %1055 = vmatpush1.msra.mxu0 0.0
        %1056 = vmatprep.subr.mxu0 0.0
        %1057 = vmatpush1.msra.mxu0 0.0
        %1058 = vmatprep.subr.mxu0 0.0
        %1059 = vmatpush1.msra.mxu0 0.0
        %1060 = vmatprep.subr.mxu0 0.0
        %1061 = vmatpush1.msra.mxu0 0.0
        %1062 = vmatprep.subr.mxu0 0.0
        %1063 = vmatpush1.msra.mxu0 0.0
        %1064 = vmatprep.subr.mxu0 0.0
        %1065 = vmatpush1.msra.mxu0 0.0
        %1066 = vmatprep.subr.mxu0 0.0
        %1067 = vmatpush1.msra.mxu0 0.0
        %1068 = vmatprep.subr.mxu0 0.0
        %1069 = vmatpush1.msra.mxu0 0.0
        %1070 = vmatprep.subr.mxu0 0.0
        %1071 = vmatpush1.msra.mxu0 0.0
        %1072 = vmatprep.subr.mxu0 0.0
        %1073 = vmatpush1.msra.mxu0 0.0
        %1074 = vmatprep.subr.mxu0 0.0
        %1075 = vmatpush1.msra.mxu0 0.0
        %1076 = vmatprep.subr.mxu0 0.0
        %1077 = vmatpush1.msra.mxu0 0.0
        %1078 = vmatprep.subr.mxu0 0.0
        %1079 = vmatpush1.msra.mxu0 0.0
        %1080 = vmatprep.subr.mxu0 0.0
        %1081 = vmatpush1.msra.mxu0 0.0
        %1082 = vmatprep.subr.mxu0 0.0
        %1083 = vmatpush1.msra.mxu0 0.0
        %1084 = vmatprep.mubr.f32.mxu0 0.0
        %1085 = vmatmul.mubr.f32.gmra.mrb[0].mxu0 %v1018
        %v1086 = vpop.f32.mrb[0].mxu0
        %v1087 = vadd.f32 0.0, %v1086
        %v1088 = vpop.f32.mrb[0].mxu0
        %1089 = vdwg.mxu0
        %1091 = vrot.lane.b32.xlu0 %v935, 16
        %v1092 = vpop.permute.xlu0 %1091
        %1095 = vrot.lane.b32.xlu0 %v1011, 32
        %v1096 = vpop.permute.xlu0 %1095
        %1099 = vrot.lane.b32.xlu0 %v1087, 48
        %v1100 = vpop.permute.xlu0 %1099
        %v1102 = vsel %vm438, %v859, %v1092
        %v1103 = vsel %vm432, %v1102, %v1096
        %vm1104 = vcmask 392192
        %v1105 = vsel %vm1104, %v1103, %v1100
        %v1106 = vld [vmem:[#allocation7] sm:$0xff]
        %v1107 = vld [vmem:[#allocation7 + $0x8] sm:$0xff]
        %v1108 = vld [vmem:[#allocation7 + $0x10] sm:$0xff]
        %v1109 = vld [vmem:[#allocation7 + $0x18] sm:$0xff]
        %v1110 = vld [vmem:[#allocation7 + $0x20] sm:$0xff]
        %v1111 = vld [vmem:[#allocation7 + $0x28] sm:$0xff]
        %v1112 = vld [vmem:[#allocation7 + $0x30] sm:$0xff]
        %v1113 = vld [vmem:[#allocation7 + $0x38] sm:$0xff]
        %v1114 = vlaneseq
        %v1115 = vshrl.u32 %v1114, 7
        %v1116 = vsub.s32 0, %v1115
        %v1117 = vrot.slane %v325, %v1116
        %v1119 = vsel %vm349, %v1105, 0
        %1121 = vmatprep.subr.mxu0 0.0
        %1122 = vmatpush1.msra.mxu0 %v1106
        %1123 = vmatprep.subr.mxu0 0.0
        %1124 = vmatpush1.msra.mxu0 %v1107
        %1125 = vmatprep.subr.mxu0 0.0
        %1126 = vmatpush1.msra.mxu0 %v1108
        %1127 = vmatprep.subr.mxu0 0.0
        %1128 = vmatpush1.msra.mxu0 %v1109
        %1129 = vmatprep.subr.mxu0 0.0
        %1130 = vmatpush1.msra.mxu0 %v1110
        %1131 = vmatprep.subr.mxu0 0.0
        %1132 = vmatpush1.msra.mxu0 %v1111
        %1133 = vmatprep.subr.mxu0 0.0
        %1134 = vmatpush1.msra.mxu0 %v1112
        %1135 = vmatprep.subr.mxu0 0.0
        %1136 = vmatpush1.msra.mxu0 %v1113
        %1137 = vmatprep.subr.mxu0 0.0
        %1138 = vmatpush1.msra.mxu0 0.0
        %1139 = vmatprep.subr.mxu0 0.0
        %1140 = vmatpush1.msra.mxu0 0.0
        %1141 = vmatprep.subr.mxu0 0.0
        %1142 = vmatpush1.msra.mxu0 0.0
        %1143 = vmatprep.subr.mxu0 0.0
        %1144 = vmatpush1.msra.mxu0 0.0
        %1145 = vmatprep.subr.mxu0 0.0
        %1146 = vmatpush1.msra.mxu0 0.0
        %1147 = vmatprep.subr.mxu0 0.0
        %1148 = vmatpush1.msra.mxu0 0.0
        %1149 = vmatprep.subr.mxu0 0.0
        %1150 = vmatpush1.msra.mxu0 0.0
        %1151 = vmatprep.subr.mxu0 0.0
        %1152 = vmatpush1.msra.mxu0 0.0
        %1153 = vmatprep.subr.mxu0 0.0
        %1154 = vmatpush1.msra.mxu0 0.0
        %1155 = vmatprep.subr.mxu0 0.0
        %1156 = vmatpush1.msra.mxu0 0.0
        %1157 = vmatprep.subr.mxu0 0.0
        %1158 = vmatpush1.msra.mxu0 0.0
        %1159 = vmatprep.subr.mxu0 0.0
        %1160 = vmatpush1.msra.mxu0 0.0
        %1161 = vmatprep.subr.mxu0 0.0
        %1162 = vmatpush1.msra.mxu0 0.0
        %1163 = vmatprep.subr.mxu0 0.0
        %1164 = vmatpush1.msra.mxu0 0.0
        %1165 = vmatprep.subr.mxu0 0.0
        %1166 = vmatpush1.msra.mxu0 0.0
        %1167 = vmatprep.subr.mxu0 0.0
        %1168 = vmatpush1.msra.mxu0 0.0
        %1169 = vmatprep.subr.mxu0 0.0
        %1170 = vmatpush1.msra.mxu0 0.0
        %1171 = vmatprep.subr.mxu0 0.0
        %1172 = vmatpush1.msra.mxu0 0.0
        %1173 = vmatprep.subr.mxu0 0.0
        %1174 = vmatpush1.msra.mxu0 0.0
        %1175 = vmatprep.subr.mxu0 0.0
        %1176 = vmatpush1.msra.mxu0 0.0
        %1177 = vmatprep.subr.mxu0 0.0
        %1178 = vmatpush1.msra.mxu0 0.0
        %1179 = vmatprep.subr.mxu0 0.0
        %1180 = vmatpush1.msra.mxu0 0.0
        %1181 = vmatprep.subr.mxu0 0.0
        %1182 = vmatpush1.msra.mxu0 0.0
        %1183 = vmatprep.subr.mxu0 0.0
        %1184 = vmatpush1.msra.mxu0 0.0
        %1185 = vmatprep.mubr.f32.mxu0 0.0
        %1186 = vmatmul.mubr.f32.gmra.mrb[0].mxu0 %v1119
        %v1187 = vpop.f32.mrb[0].mxu0
        %v1188 = vadd.f32 %v1117, %v1187
        %v1189 = vpop.f32.mrb[0].mxu0
        %1190 = vdwg.mxu0
        %v1191 = vadd.f32 %v332, %v1188
        %v1192 = vsel %vm349, %v1191, 0.0
        %1193 = vadd.xlane.f32.xlu0 %v1192
        %v1194 = vpop.xlane.xlu0 %1193
        %v1195 = vrcp.pop 64.0
        %v1196 = vmul.f32 %v1194, %v1195
        %v1197 = vsub.f32 %v1191, %v1196
        %v1198 = vmul.f32 %v1197, %v1197
        %v1199 = vsel %vm349, %v1198, 0.0
        %1200 = vadd.xlane.f32.xlu0 %v1199
        %v1201 = vpop.xlane.xlu0 %1200
        %v1202 = vmul.f32 %v1201, %v1195
        %v1203 = vadd.f32 %v1202, 1e-05
        %v1204 = vrsqrt.pop %v1203
        %v1205 = vmul.f32 %v1197, %v1204
        %v1206 = vlaneseq
        %v1207 = vshrl.u32 %v1206, 7
        %v1208 = vsub.s32 0, %v1207
        %v1209 = vrot.slane %v326, %v1208
        %v1210 = vmul.f32 %v1205, %v1209
        %v1211 = vlaneseq
        %v1212 = vshrl.u32 %v1211, 7
        %v1213 = vsub.s32 0, %v1212
        %v1214 = vrot.slane %v327, %v1213
        %v1215 = vadd.f32 %v1210, %v1214
        %v1216 = vld [vmem:[#allocation8] sm:$0xff]
        %v1217 = vld [vmem:[#allocation8 + $0x8] sm:$0xff]
        %v1218 = vld [vmem:[#allocation8 + $0x10] sm:$0xff]
        %v1219 = vld [vmem:[#allocation8 + $0x18] sm:$0xff]
        %v1220 = vld [vmem:[#allocation8 + $0x20] sm:$0xff]
        %v1221 = vld [vmem:[#allocation8 + $0x28] sm:$0xff]
        %v1222 = vld [vmem:[#allocation8 + $0x30] sm:$0xff]
        %v1223 = vld [vmem:[#allocation8 + $0x38] sm:$0xff]
        %v1224 = vlaneseq
        %v1225 = vshrl.u32 %v1224, 7
        %v1226 = vsub.s32 0, %v1225
        %v1227 = vrot.slane %v328, %v1226
        %v1229 = vsel %vm349, %v1215, 0
        %1231 = vmatprep.subr.mxu0 0.0
        %1232 = vmatpush1.msra.mxu0 %v1216
        %1233 = vmatprep.subr.mxu0 0.0
        %1234 = vmatpush1.msra.mxu0 %v1217
        %1235 = vmatprep.subr.mxu0 0.0
        %1236 = vmatpush1.msra.mxu0 %v1218
        %1237 = vmatprep.subr.mxu0 0.0
        %1238 = vmatpush1.msra.mxu0 %v1219
        %1239 = vmatprep.subr.mxu0 0.0
        %1240 = vmatpush1.msra.mxu0 %v1220
        %1241 = vmatprep.subr.mxu0 0.0
        %1242 = vmatpush1.msra.mxu0 %v1221
        %1243 = vmatprep.subr.mxu0 0.0
        %1244 = vmatpush1.msra.mxu0 %v1222
        %1245 = vmatprep.subr.mxu0 0.0
        %1246 = vmatpush1.msra.mxu0 %v1223
        %1247 = vmatprep.subr.mxu0 0.0
        %1248 = vmatpush1.msra.mxu0 0.0
        %1249 = vmatprep.subr.mxu0 0.0
        %1250 = vmatpush1.msra.mxu0 0.0
        %1251 = vmatprep.subr.mxu0 0.0
        %1252 = vmatpush1.msra.mxu0 0.0
        %1253 = vmatprep.subr.mxu0 0.0
        %1254 = vmatpush1.msra.mxu0 0.0
        %1255 = vmatprep.subr.mxu0 0.0
        %1256 = vmatpush1.msra.mxu0 0.0
        %1257 = vmatprep.subr.mxu0 0.0
        %1258 = vmatpush1.msra.mxu0 0.0
        %1259 = vmatprep.subr.mxu0 0.0
        %1260 = vmatpush1.msra.mxu0 0.0
        %1261 = vmatprep.subr.mxu0 0.0
        %1262 = vmatpush1.msra.mxu0 0.0
        %1263 = vmatprep.subr.mxu0 0.0
        %1264 = vmatpush1.msra.mxu0 0.0
        %1265 = vmatprep.subr.mxu0 0.0
        %1266 = vmatpush1.msra.mxu0 0.0
        %1267 = vmatprep.subr.mxu0 0.0
        %1268 = vmatpush1.msra.mxu0 0.0
        %1269 = vmatprep.subr.mxu0 0.0
        %1270 = vmatpush1.msra.mxu0 0.0
        %1271 = vmatprep.subr.mxu0 0.0
        %1272 = vmatpush1.msra.mxu0 0.0
        %1273 = vmatprep.subr.mxu0 0.0
        %1274 = vmatpush1.msra.mxu0 0.0
        %1275 = vmatprep.subr.mxu0 0.0
        %1276 = vmatpush1.msra.mxu0 0.0
        %1277 = vmatprep.subr.mxu0 0.0
        %1278 = vmatpush1.msra.mxu0 0.0
        %1279 = vmatprep.subr.mxu0 0.0
        %1280 = vmatpush1.msra.mxu0 0.0
        %1281 = vmatprep.subr.mxu0 0.0
        %1282 = vmatpush1.msra.mxu0 0.0
        %1283 = vmatprep.subr.mxu0 0.0
        %1284 = vmatpush1.msra.mxu0 0.0
        %1285 = vmatprep.subr.mxu0 0.0
        %1286 = vmatpush1.msra.mxu0 0.0
        %1287 = vmatprep.subr.mxu0 0.0
        %1288 = vmatpush1.msra.mxu0 0.0
        %1289 = vmatprep.subr.mxu0 0.0
        %1290 = vmatpush1.msra.mxu0 0.0
        %1291 = vmatprep.subr.mxu0 0.0
        %1292 = vmatpush1.msra.mxu0 0.0
        %1293 = vmatprep.subr.mxu0 0.0
        %1294 = vmatpush1.msra.mxu0 0.0
        %1295 = vmatprep.mubr.f32.mxu0 0.0
        %1296 = vmatmul.mubr.f32.gmra.mrb[0].mxu0 %v1229
        %v1297 = vpop.f32.mrb[0].mxu0
        %v1298 = vadd.f32 %v1227, %v1297
        %v1299 = vpop.f32.mrb[0].mxu0
        %1300 = vdwg.mxu0
        %v1301 = vmax.f32 %v1298, 0.0
        %v1302 = vld [vmem:[#allocation10] sm:$0xff]
        %v1303 = vld [vmem:[#allocation10 + $0x8] sm:$0xff]
        %v1304 = vld [vmem:[#allocation10 + $0x10] sm:$0xff]
        %v1305 = vld [vmem:[#allocation10 + $0x18] sm:$0xff]
        %v1306 = vld [vmem:[#allocation10 + $0x20] sm:$0xff]
        %v1307 = vld [vmem:[#allocation10 + $0x28] sm:$0xff]
        %v1308 = vld [vmem:[#allocation10 + $0x30] sm:$0xff]
        %v1309 = vld [vmem:[#allocation10 + $0x38] sm:$0xff]
        %v1310 = vlaneseq
        %v1311 = vshrl.u32 %v1310, 7
        %v1312 = vsub.s32 0, %v1311
        %v1313 = vrot.slane %v329, %v1312
        %v1315 = vsel %vm349, %v1301, 0
        %1317 = vmatprep.subr.mxu0 0.0
        %1318 = vmatpush1.msra.mxu0 %v1302
        %1319 = vmatprep.subr.mxu0 0.0
        %1320 = vmatpush1.msra.mxu0 %v1303
        %1321 = vmatprep.subr.mxu0 0.0
        %1322 = vmatpush1.msra.mxu0 %v1304
        %1323 = vmatprep.subr.mxu0 0.0
        %1324 = vmatpush1.msra.mxu0 %v1305
        %1325 = vmatprep.subr.mxu0 0.0
        %1326 = vmatpush1.msra.mxu0 %v1306
        %1327 = vmatprep.subr.mxu0 0.0
        %1328 = vmatpush1.msra.mxu0 %v1307
        %1329 = vmatprep.subr.mxu0 0.0
        %1330 = vmatpush1.msra.mxu0 %v1308
        %1331 = vmatprep.subr.mxu0 0.0
        %1332 = vmatpush1.msra.mxu0 %v1309
        %1333 = vmatprep.subr.mxu0 0.0
        %1334 = vmatpush1.msra.mxu0 0.0
        %1335 = vmatprep.subr.mxu0 0.0
        %1336 = vmatpush1.msra.mxu0 0.0
        %1337 = vmatprep.subr.mxu0 0.0
        %1338 = vmatpush1.msra.mxu0 0.0
        %1339 = vmatprep.subr.mxu0 0.0
        %1340 = vmatpush1.msra.mxu0 0.0
        %1341 = vmatprep.subr.mxu0 0.0
        %1342 = vmatpush1.msra.mxu0 0.0
        %1343 = vmatprep.subr.mxu0 0.0
        %1344 = vmatpush1.msra.mxu0 0.0
        %1345 = vmatprep.subr.mxu0 0.0
        %1346 = vmatpush1.msra.mxu0 0.0
        %1347 = vmatprep.subr.mxu0 0.0
        %1348 = vmatpush1.msra.mxu0 0.0
        %1349 = vmatprep.subr.mxu0 0.0
        %1350 = vmatpush1.msra.mxu0 0.0
        %1351 = vmatprep.subr.mxu0 0.0
        %1352 = vmatpush1.msra.mxu0 0.0
        %1353 = vmatprep.subr.mxu0 0.0
        %1354 = vmatpush1.msra.mxu0 0.0
        %1355 = vmatprep.subr.mxu0 0.0
        %1356 = vmatpush1.msra.mxu0 0.0
        %1357 = vmatprep.subr.mxu0 0.0
        %1358 = vmatpush1.msra.mxu0 0.0
        %1359 = vmatprep.subr.mxu0 0.0
        %1360 = vmatpush1.msra.mxu0 0.0
        %1361 = vmatprep.subr.mxu0 0.0
        %1362 = vmatpush1.msra.mxu0 0.0
        %1363 = vmatprep.subr.mxu0 0.0
        %1364 = vmatpush1.msra.mxu0 0.0
        %1365 = vmatprep.subr.mxu0 0.0
        %1366 = vmatpush1.msra.mxu0 0.0
        %1367 = vmatprep.subr.mxu0 0.0
        %1368 = vmatpush1.msra.mxu0 0.0
        %1369 = vmatprep.subr.mxu0 0.0
        %1370 = vmatpush1.msra.mxu0 0.0
        %1371 = vmatprep.subr.mxu0 0.0
        %1372 = vmatpush1.msra.mxu0 0.0
        %1373 = vmatprep.subr.mxu0 0.0
        %1374 = vmatpush1.msra.mxu0 0.0
        %1375 = vmatprep.subr.mxu0 0.0
        %1376 = vmatpush1.msra.mxu0 0.0
        %1377 = vmatprep.subr.mxu0 0.0
        %1378 = vmatpush1.msra.mxu0 0.0
        %1379 = vmatprep.subr.mxu0 0.0
        %1380 = vmatpush1.msra.mxu0 0.0
        %1381 = vmatprep.mubr.f32.mxu0 0.0
        %1382 = vmatmul.mubr.f32.gmra.mrb[0].mxu0 %v1315
        %v1383 = vpop.f32.mrb[0].mxu0
        %v1384 = vadd.f32 %v1313, %v1383
        %v1385 = vpop.f32.mrb[0].mxu0
        %1386 = vdwg.mxu0
        %v1387 = vadd.f32 %v1384, %v1215
        %v1388 = vsel %vm349, %v1387, 0.0
        %1389 = vadd.xlane.f32.xlu0 %v1388
        %v1390 = vpop.xlane.xlu0 %1389
        %v1391 = vmul.f32 %v1390, %v1195
        %v1392 = vsub.f32 %v1387, %v1391
        %v1393 = vmul.f32 %v1392, %v1392
        %v1394 = vsel %vm349, %v1393, 0.0
        %1395 = vadd.xlane.f32.xlu0 %v1394
        %v1396 = vpop.xlane.xlu0 %1395
        %v1397 = vmul.f32 %v1396, %v1195
        %v1398 = vadd.f32 %v1397, 1e-05
        %v1399 = vrsqrt.pop %v1398
        %v1400 = vmul.f32 %v1392, %v1399
        %v1401 = vlaneseq
        %v1402 = vshrl.u32 %v1401, 7
        %v1403 = vsub.s32 0, %v1402
        %v1404 = vrot.slane %v330, %v1403
        %v1405 = vmul.f32 %v1400, %v1404
        %v1406 = vlaneseq
        %v1407 = vshrl.u32 %v1406, 7
        %v1408 = vsub.s32 0, %v1407
        %v1409 = vrot.slane %v331, %v1408
        %v1410 = vadd.f32 %v1405, %v1409
        %1411 = vst.msk [vmem:[%s324] sm:$0xff] %vm349, %v1410
        %s1412 = sand.u32 %s164, 1
        %s1413 = scalar_lea.sflag [#allocation4], %s1412
        %s1414 = sand.u32 %s164, 1
        %s1415 = smul.addr %s1414, 8
        %s1416 = scalar_lea.vmem [#allocation11], %s1415
        // Predicated region
        $region65: #{tpu_custom_call.1} parent=43 // pred_check
          %p1417 = pneg %p174
        $region66: #{tpu_custom_call.1} parent=43 // pred_check_branch
          %1419 = sbr.rel (%p1417) target = $region68
        $region67: #{tpu_custom_call.1} parent=43 // pred_region
          %s1421 = ssub.s32 128, 128
          %1422 = vsyncadd %s1413, %s1421
          %s1423 = smul.addr %s25, 128
          %s1424 = scalar_lea.hbm %s6, %s1423
          %s1426 = sshll.u32 %s1416, 4
          %s1427 = int_to_ptr.vmem [resolvable:$true] %s1426
          %1429 = dma.vmem_to_hbm [thread:$0]  %s1427, 128, %s1424, %s1413
        $region68: #{tpu_custom_call.1} parent=43 // pred_fallthru
          _
      $region44: #{tpu_custom_call.1} parent=5 // pred_fallthru
        _
      %p1430 = scmp.le.s32.totalorder 2, %s20
      // Predicated region
      $region69: #{tpu_custom_call.1} parent=5 // pred_check
        %p1431 = pneg %p1430
      $region70: #{tpu_custom_call.1} parent=5 // pred_check_branch
        %1433 = sbr.rel (%p1431) target = $region72
      $region71: #{tpu_custom_call.1} parent=5 // pred_region
        %s1434 = ssub.s32 %s20, 2
        // Predicated region
        $region73: #{tpu_custom_call.1} parent=71 // pred_check
          %p1435 = pneg %p180
        $region74: #{tpu_custom_call.1} parent=71 // pred_check_branch
          %1437 = sbr.rel (%p1435) target = $region76
        $region75: #{tpu_custom_call.1} parent=71 // pred_region
          %s1438 = sand.u32 %s165, 1
          %s1439 = scalar_lea.sflag [#allocation4], %s1438
          %s1440 = sand.u32 %s165, 1
          %s1441 = smul.addr %s1440, 8
          %s1442 = scalar_lea.vmem [#allocation11], %s1441
          %1443 = dma.done %s1439, 128
        $region76: #{tpu_custom_call.1} parent=71 // pred_fallthru
          _
      $region72: #{tpu_custom_call.1} parent=5 // pred_fallthru
        _
    $region6: #{tpu_custom_call.1} parent=1 // loop_footer
      %s24 = sadd.s32 1, %s20
    $region7: #{tpu_custom_call.1} parent=1 // loop_footer_branch
      %19 = sbr.rel target = $region3
    $region8: #{tpu_custom_call.1} parent=1 // loop_exit
      _
    %1444 = vsyncpa [#allocation3], 1
    %s1445 = scalar_lea.sflag [#allocation3], 1
    %1446 = vsyncpa %s1445, 1
    %1447 = vsyncpa [#allocation6], 1
    %1448 = vsyncpa [#allocation9], 1
    %1449 = vsyncpa [#allocation4], 1
    %s1450 = scalar_lea.sflag [#allocation4], 1
    %1451 = vsyncpa %s1450, 1

</llo_original>
